<compile_context>
chip_gen: v7x
topology: tpu7x:2x2x1
jax: 0.10.0
libtpu: 0.0.40
codegen_flags: <defaults>
</compile_context>

<pallas_src>
import jax
import jax.numpy as jnp
import numpy as np
from jax.experimental import pallas as pl
from jax.experimental.pallas import tpu as pltpu

# ----- config (small, consistent with the module) -----
DIM = 32          # config.dim
HEADS = 4         # config.heads
DIM_HEAD = 8      # config.dim_head
INNER = HEADS * DIM_HEAD          # 32
SCALE = DIM_HEAD ** (-0.5)
MU = 0.5          # config.mu
EPS = 1e-5        # nn.LayerNorm default eps
B = 2             # batch
N = 8             # sequence length
ROWS = B * N      # 16 rows, processed in a single grid step


def postln_attn_kernel(x_ref, wqkv_ref, wout_ref, params_ref, o_ref):
    # Entire (B*N, D) problem handled in one step (no per-batch grid overhead).
    x = x_ref[...].astype(jnp.float32)                      # (ROWS, D)
    wqkv = wqkv_ref[...].astype(jnp.float32)                # (D, 3*INNER)
    wout = wout_ref[...].astype(jnp.float32)                # (INNER, D)
    params = params_ref[...].astype(jnp.float32)            # (3, D): bout, gamma, beta
    bout = params[0:1, :]
    gamma = params[1:2, :]
    beta = params[2:3, :]

    # qkv projection (no bias) over all B*N rows at once -> better sublane use.
    qkv = jnp.dot(x, wqkv, preferred_element_type=jnp.float32)   # (ROWS, 3*INNER)

    # Attention via static unrolled loops over heads and batch elements,
    # operating on lane-contiguous 2-D slices (no 3-D reshape/transpose).
    head_outs = []
    for h in range(HEADS):
        q_h = qkv[:, 0 * INNER + h * DIM_HEAD: 0 * INNER + (h + 1) * DIM_HEAD]  # (ROWS, DH)
        k_h = qkv[:, 1 * INNER + h * DIM_HEAD: 1 * INNER + (h + 1) * DIM_HEAD]
        v_h = qkv[:, 2 * INNER + h * DIM_HEAD: 2 * INNER + (h + 1) * DIM_HEAD]
        batch_outs = []
        for b in range(B):
            qb = q_h[b * N:(b + 1) * N, :]                   # (N, DH)
            kb = k_h[b * N:(b + 1) * N, :]
            vb = v_h[b * N:(b + 1) * N, :]
            # scores: (N, N), contraction over the 8-wide head dim
            dots = jax.lax.dot_general(
                qb, kb, (((1,), (1,)), ((), ())),
                preferred_element_type=jnp.float32) * SCALE
            dots = dots - jnp.max(dots, axis=-1, keepdims=True)
            e = jnp.exp(dots)
            denom = jnp.sum(e, axis=-1, keepdims=True)
            attn = e * pl.reciprocal(denom, approx=True)     # EUP, not VALU divide
            batch_outs.append(
                jnp.dot(attn, vb, preferred_element_type=jnp.float32))  # (N, DH)
        head_outs.append(jnp.concatenate(batch_outs, axis=0))           # (ROWS, DH)
    out = jnp.concatenate(head_outs, axis=1)                            # (ROWS, INNER)

    # output projection (+ bias); dropout is identity at inference
    out = jnp.dot(out, wout, preferred_element_type=jnp.float32) + bout  # (ROWS, D)

    # post-LN residual: LayerNorm(attn_out + mu * x); row-wise so B*N vectorizes.
    y = out + MU * x
    mean = jnp.mean(y, axis=-1, keepdims=True)
    var = jnp.mean((y - mean) ** 2, axis=-1, keepdims=True)  # biased var (PyTorch LN)
    y_hat = (y - mean) * jax.lax.rsqrt(var + EPS)
    o_ref[...] = (y_hat * gamma + beta).astype(o_ref.dtype)


@jax.jit
def postln_attn_block(x, wqkv, wout, bout, gamma, beta):
    b, n, d = x.shape
    rows = b * n
    x2d = x.reshape(rows, d)
    # Pack the three tiny per-channel vectors into a single (3, D) array -> one DMA.
    params = jnp.concatenate([bout, gamma, beta], axis=0)    # (3, D)

    grid_spec = pltpu.PrefetchScalarGridSpec(
        num_scalar_prefetch=0,
        grid=(1,),                                           # single step: no grid overhead
        in_specs=[
            pl.BlockSpec((rows, d), lambda i: (0, 0)),       # x (flattened over batch)
            pl.BlockSpec((d, 3 * INNER), lambda i: (0, 0)),  # Wqkv
            pl.BlockSpec((INNER, d), lambda i: (0, 0)),      # Wout
            pl.BlockSpec((3, d), lambda i: (0, 0)),          # packed bout/gamma/beta
        ],
        out_specs=pl.BlockSpec((rows, d), lambda i: (0, 0)),
    )
    out2d = pl.pallas_call(
        postln_attn_kernel,
        out_shape=jax.ShapeDtypeStruct((rows, d), x.dtype),
        grid_spec=grid_spec,
        compiler_params=pltpu.CompilerParams(
            dimension_semantics=("arbitrary",)),
    )(x2d, wqkv, wout, params)
    return out2d.reshape(b, n, d)


def reference(x, wqkv, wout, bout, gamma, beta):
    """Pure-JAX reference mirroring the PyTorch forward."""
    x32 = x.astype(jnp.float32)
    qkv = x32 @ wqkv.astype(jnp.float32)
    q, k, v = jnp.split(qkv, 3, axis=-1)
    def heads(t):  # b n (h d) -> b h n d
        b_, n_, _ = t.shape
        return t.reshape(b_, n_, HEADS, DIM_HEAD).transpose(0, 2, 1, 3)
    q, k, v = heads(q), heads(k), heads(v)
    dots = jnp.einsum('bhnd,bhmd->bhnm', q, k) * SCALE
    attn = jax.nn.softmax(dots, axis=-1)
    out = jnp.einsum('bhnm,bhmd->bhnd', attn, v)
    out = out.transpose(0, 2, 1, 3).reshape(x.shape[0], x.shape[1], INNER)
    out = out @ wout.astype(jnp.float32) + bout.astype(jnp.float32)[0]
    y = out + MU * x32
    mean = jnp.mean(y, axis=-1, keepdims=True)
    var = jnp.mean((y - mean) ** 2, axis=-1, keepdims=True)
    y_hat = (y - mean) / jnp.sqrt(var + EPS)
    return y_hat * gamma.astype(jnp.float32)[0] + beta.astype(jnp.float32)[0]


if __name__ == "__main__":
    key = jax.random.PRNGKey(0)
    kx, kq, ko, kb = jax.random.split(key, 4)

    x = jax.random.normal(kx, (B, N, DIM), dtype=jnp.float32)

    # Deterministic synthetic parameters (Linear weights stored as (in, out)).
    wqkv = 0.02 * jax.random.normal(kq, (DIM, 3 * INNER), dtype=jnp.float32)
    wout = 0.02 * jax.random.normal(ko, (INNER, DIM), dtype=jnp.float32)
    bout = 0.01 * jax.random.normal(kb, (1, DIM), dtype=jnp.float32)
    gamma = jnp.ones((1, DIM), dtype=jnp.float32)   # LayerNorm weight init
    beta = jnp.zeros((1, DIM), dtype=jnp.float32)   # LayerNorm bias init

    out = postln_attn_block(x, wqkv, wout, bout, gamma, beta)
    out = jax.block_until_ready(out)

    ref = reference(x, wqkv, wout, bout, gamma, beta)
    np.testing.assert_allclose(np.asarray(out), np.asarray(ref), atol=1e-4, rtol=1e-4)

    print("KERNEL_OK")
</pallas_src>

<mosaic_0001>
module attributes {stable_mosaic.version = 11 : i64} {
  func.func @postln_attn_kernel(%arg0: i32, %arg1: memref<16x32xf32, #tpu.memory_space<vmem>>, %arg2: memref<32x96xf32, #tpu.memory_space<vmem>>, %arg3: memref<32x32xf32, #tpu.memory_space<vmem>>, %arg4: memref<3x32xf32, #tpu.memory_space<vmem>>, %arg5: memref<16x32xf32, #tpu.memory_space<vmem>>) attributes {dimension_semantics = [#tpu.dimension_semantics<arbitrary>], iteration_bounds = array<i64: 1>, scalar_prefetch = 0 : i64, scratch_operands = 0 : i64, tpu.core_type = #tpu.core_type<tc>, window_params = [{pipeline_mode = #tpu.pipeline_mode<synchronous>, transform_indices = @transform_0, window_bounds = array<i64: 16, 32>}, {pipeline_mode = #tpu.pipeline_mode<synchronous>, transform_indices = @transform_1, window_bounds = array<i64: 32, 96>}, {pipeline_mode = #tpu.pipeline_mode<synchronous>, transform_indices = @transform_2, window_bounds = array<i64: 32, 32>}, {pipeline_mode = #tpu.pipeline_mode<synchronous>, transform_indices = @transform_3, window_bounds = array<i64: 3, 32>}, {pipeline_mode = #tpu.pipeline_mode<synchronous>, transform_indices = @transform_4, window_bounds = array<i64: 16, 32>}]} {
    %c0 = arith.constant 0 : index
    %c0_0 = arith.constant 0 : index
    %0 = vector.load %arg1[%c0, %c0_0] : memref<16x32xf32, #tpu.memory_space<vmem>>, vector<16x32xf32>
    %c0_1 = arith.constant 0 : index
    %c0_2 = arith.constant 0 : index
    %1 = vector.load %arg2[%c0_1, %c0_2] : memref<32x96xf32, #tpu.memory_space<vmem>>, vector<32x96xf32>
    %c0_3 = arith.constant 0 : index
    %c0_4 = arith.constant 0 : index
    %2 = vector.load %arg3[%c0_3, %c0_4] : memref<32x32xf32, #tpu.memory_space<vmem>>, vector<32x32xf32>
    %c0_5 = arith.constant 0 : index
    %c0_6 = arith.constant 0 : index
    %3 = vector.load %arg4[%c0_5, %c0_6] : memref<3x32xf32, #tpu.memory_space<vmem>>, vector<3x32xf32>
    %4 = vector.extract_strided_slice %3 {offsets = [0, 0], sizes = [1, 32], strides = [1, 1]} : vector<3x32xf32> to vector<1x32xf32>
    %5 = vector.extract_strided_slice %3 {offsets = [1, 0], sizes = [1, 32], strides = [1, 1]} : vector<3x32xf32> to vector<1x32xf32>
    %6 = vector.extract_strided_slice %3 {offsets = [2, 0], sizes = [1, 32], strides = [1, 1]} : vector<3x32xf32> to vector<1x32xf32>
    %cst = arith.constant dense<0.000000e+00> : vector<16x96xf32>
    %7 = tpu.matmul %0, %1, %cst {dimension_numbers = #tpu.dot_dimension_numbers<[1], [0], [0], [1], [0, 0, 1, 1], [], []>} : vector<16x32xf32>, vector<32x96xf32>, vector<16x96xf32> -> vector<16x96xf32>
    %8 = vector.extract_strided_slice %7 {offsets = [0, 0], sizes = [16, 8], strides = [1, 1]} : vector<16x96xf32> to vector<16x8xf32>
    %9 = vector.extract_strided_slice %7 {offsets = [0, 32], sizes = [16, 8], strides = [1, 1]} : vector<16x96xf32> to vector<16x8xf32>
    %10 = vector.extract_strided_slice %7 {offsets = [0, 64], sizes = [16, 8], strides = [1, 1]} : vector<16x96xf32> to vector<16x8xf32>
    %11 = vector.extract_strided_slice %8 {offsets = [0, 0], sizes = [8, 8], strides = [1, 1]} : vector<16x8xf32> to vector<8x8xf32>
    %12 = vector.extract_strided_slice %9 {offsets = [0, 0], sizes = [8, 8], strides = [1, 1]} : vector<16x8xf32> to vector<8x8xf32>
    %13 = vector.extract_strided_slice %10 {offsets = [0, 0], sizes = [8, 8], strides = [1, 1]} : vector<16x8xf32> to vector<8x8xf32>
    %cst_7 = arith.constant dense<0.000000e+00> : vector<8x8xf32>
    %14 = tpu.matmul %11, %12, %cst_7 {dimension_numbers = #tpu.dot_dimension_numbers<[1], [1], [0], [0], [0, 0, 1, 0], [], []>} : vector<8x8xf32>, vector<8x8xf32>, vector<8x8xf32> -> vector<8x8xf32>
    %cst_8 = arith.constant 0.353553385 : f32
    %15 = vector.broadcast %cst_8 : f32 to vector<8x8xf32>
    %16 = arith.mulf %14, %15 : vector<8x8xf32>
    %cst_9 = arith.constant dense<0xFF800000> : vector<8xf32>
    %17 = vector.multi_reduction <maximumf>, %16, %cst_9 [1] : vector<8x8xf32> to vector<8xf32>
    %18 = vector.shape_cast %17 : vector<8xf32> to vector<8x1xf32>
    %19 = vector.broadcast %18 : vector<8x1xf32> to vector<8x8xf32>
    %20 = arith.subf %16, %19 : vector<8x8xf32>
    %21 = math.exp %20 : vector<8x8xf32>
    %cst_10 = arith.constant dense<0.000000e+00> : vector<8xf32>
    %22 = vector.multi_reduction <add>, %21, %cst_10 [1] : vector<8x8xf32> to vector<8xf32>
    %23 = vector.shape_cast %22 : vector<8xf32> to vector<8x1xf32>
    %24 = tpu.reciprocal %23 {approx = true} : vector<8x1xf32> -> vector<8x1xf32>
    %25 = vector.broadcast %24 : vector<8x1xf32> to vector<8x8xf32>
    %26 = arith.mulf %21, %25 : vector<8x8xf32>
    %cst_11 = arith.constant dense<0.000000e+00> : vector<8x8xf32>
    %27 = tpu.matmul %26, %13, %cst_11 {dimension_numbers = #tpu.dot_dimension_numbers<[1], [0], [0], [1], [0, 0, 1, 1], [], []>} : vector<8x8xf32>, vector<8x8xf32>, vector<8x8xf32> -> vector<8x8xf32>
    %28 = vector.extract_strided_slice %8 {offsets = [8, 0], sizes = [8, 8], strides = [1, 1]} : vector<16x8xf32> to vector<8x8xf32>
    %29 = vector.extract_strided_slice %9 {offsets = [8, 0], sizes = [8, 8], strides = [1, 1]} : vector<16x8xf32> to vector<8x8xf32>
    %30 = vector.extract_strided_slice %10 {offsets = [8, 0], sizes = [8, 8], strides = [1, 1]} : vector<16x8xf32> to vector<8x8xf32>
    %cst_12 = arith.constant dense<0.000000e+00> : vector<8x8xf32>
    %31 = tpu.matmul %28, %29, %cst_12 {dimension_numbers = #tpu.dot_dimension_numbers<[1], [1], [0], [0], [0, 0, 1, 0], [], []>} : vector<8x8xf32>, vector<8x8xf32>, vector<8x8xf32> -> vector<8x8xf32>
    %cst_13 = arith.constant 0.353553385 : f32
    %32 = vector.broadcast %cst_13 : f32 to vector<8x8xf32>
    %33 = arith.mulf %31, %32 : vector<8x8xf32>
    %cst_14 = arith.constant dense<0xFF800000> : vector<8xf32>
    %34 = vector.multi_reduction <maximumf>, %33, %cst_14 [1] : vector<8x8xf32> to vector<8xf32>
    %35 = vector.shape_cast %34 : vector<8xf32> to vector<8x1xf32>
    %36 = vector.broadcast %35 : vector<8x1xf32> to vector<8x8xf32>
    %37 = arith.subf %33, %36 : vector<8x8xf32>
    %38 = math.exp %37 : vector<8x8xf32>
    %cst_15 = arith.constant dense<0.000000e+00> : vector<8xf32>
    %39 = vector.multi_reduction <add>, %38, %cst_15 [1] : vector<8x8xf32> to vector<8xf32>
    %40 = vector.shape_cast %39 : vector<8xf32> to vector<8x1xf32>
    %41 = tpu.reciprocal %40 {approx = true} : vector<8x1xf32> -> vector<8x1xf32>
    %42 = vector.broadcast %41 : vector<8x1xf32> to vector<8x8xf32>
    %43 = arith.mulf %38, %42 : vector<8x8xf32>
    %cst_16 = arith.constant dense<0.000000e+00> : vector<8x8xf32>
    %44 = tpu.matmul %43, %30, %cst_16 {dimension_numbers = #tpu.dot_dimension_numbers<[1], [0], [0], [1], [0, 0, 1, 1], [], []>} : vector<8x8xf32>, vector<8x8xf32>, vector<8x8xf32> -> vector<8x8xf32>
    %45 = tpu.concatenate %27, %44 in 0 : vector<8x8xf32>, vector<8x8xf32> -> vector<16x8xf32>
    %46 = vector.extract_strided_slice %7 {offsets = [0, 8], sizes = [16, 8], strides = [1, 1]} : vector<16x96xf32> to vector<16x8xf32>
    %47 = vector.extract_strided_slice %7 {offsets = [0, 40], sizes = [16, 8], strides = [1, 1]} : vector<16x96xf32> to vector<16x8xf32>
    %48 = vector.extract_strided_slice %7 {offsets = [0, 72], sizes = [16, 8], strides = [1, 1]} : vector<16x96xf32> to vector<16x8xf32>
    %49 = vector.extract_strided_slice %46 {offsets = [0, 0], sizes = [8, 8], strides = [1, 1]} : vector<16x8xf32> to vector<8x8xf32>
    %50 = vector.extract_strided_slice %47 {offsets = [0, 0], sizes = [8, 8], strides = [1, 1]} : vector<16x8xf32> to vector<8x8xf32>
    %51 = vector.extract_strided_slice %48 {offsets = [0, 0], sizes = [8, 8], strides = [1, 1]} : vector<16x8xf32> to vector<8x8xf32>
    %cst_17 = arith.constant dense<0.000000e+00> : vector<8x8xf32>
    %52 = tpu.matmul %49, %50, %cst_17 {dimension_numbers = #tpu.dot_dimension_numbers<[1], [1], [0], [0], [0, 0, 1, 0], [], []>} : vector<8x8xf32>, vector<8x8xf32>, vector<8x8xf32> -> vector<8x8xf32>
    %cst_18 = arith.constant 0.353553385 : f32
    %53 = vector.broadcast %cst_18 : f32 to vector<8x8xf32>
    %54 = arith.mulf %52, %53 : vector<8x8xf32>
    %cst_19 = arith.constant dense<0xFF800000> : vector<8xf32>
    %55 = vector.multi_reduction <maximumf>, %54, %cst_19 [1] : vector<8x8xf32> to vector<8xf32>
    %56 = vector.shape_cast %55 : vector<8xf32> to vector<8x1xf32>
    %57 = vector.broadcast %56 : vector<8x1xf32> to vector<8x8xf32>
    %58 = arith.subf %54, %57 : vector<8x8xf32>
    %59 = math.exp %58 : vector<8x8xf32>
    %cst_20 = arith.constant dense<0.000000e+00> : vector<8xf32>
    %60 = vector.multi_reduction <add>, %59, %cst_20 [1] : vector<8x8xf32> to vector<8xf32>
    %61 = vector.shape_cast %60 : vector<8xf32> to vector<8x1xf32>
    %62 = tpu.reciprocal %61 {approx = true} : vector<8x1xf32> -> vector<8x1xf32>
    %63 = vector.broadcast %62 : vector<8x1xf32> to vector<8x8xf32>
    %64 = arith.mulf %59, %63 : vector<8x8xf32>
    %cst_21 = arith.constant dense<0.000000e+00> : vector<8x8xf32>
    %65 = tpu.matmul %64, %51, %cst_21 {dimension_numbers = #tpu.dot_dimension_numbers<[1], [0], [0], [1], [0, 0, 1, 1], [], []>} : vector<8x8xf32>, vector<8x8xf32>, vector<8x8xf32> -> vector<8x8xf32>
    %66 = vector.extract_strided_slice %46 {offsets = [8, 0], sizes = [8, 8], strides = [1, 1]} : vector<16x8xf32> to vector<8x8xf32>
    %67 = vector.extract_strided_slice %47 {offsets = [8, 0], sizes = [8, 8], strides = [1, 1]} : vector<16x8xf32> to vector<8x8xf32>
    %68 = vector.extract_strided_slice %48 {offsets = [8, 0], sizes = [8, 8], strides = [1, 1]} : vector<16x8xf32> to vector<8x8xf32>
    %cst_22 = arith.constant dense<0.000000e+00> : vector<8x8xf32>
    %69 = tpu.matmul %66, %67, %cst_22 {dimension_numbers = #tpu.dot_dimension_numbers<[1], [1], [0], [0], [0, 0, 1, 0], [], []>} : vector<8x8xf32>, vector<8x8xf32>, vector<8x8xf32> -> vector<8x8xf32>
    %cst_23 = arith.constant 0.353553385 : f32
    %70 = vector.broadcast %cst_23 : f32 to vector<8x8xf32>
    %71 = arith.mulf %69, %70 : vector<8x8xf32>
    %cst_24 = arith.constant dense<0xFF800000> : vector<8xf32>
    %72 = vector.multi_reduction <maximumf>, %71, %cst_24 [1] : vector<8x8xf32> to vector<8xf32>
    %73 = vector.shape_cast %72 : vector<8xf32> to vector<8x1xf32>
    %74 = vector.broadcast %73 : vector<8x1xf32> to vector<8x8xf32>
    %75 = arith.subf %71, %74 : vector<8x8xf32>
    %76 = math.exp %75 : vector<8x8xf32>
    %cst_25 = arith.constant dense<0.000000e+00> : vector<8xf32>
    %77 = vector.multi_reduction <add>, %76, %cst_25 [1] : vector<8x8xf32> to vector<8xf32>
    %78 = vector.shape_cast %77 : vector<8xf32> to vector<8x1xf32>
    %79 = tpu.reciprocal %78 {approx = true} : vector<8x1xf32> -> vector<8x1xf32>
    %80 = vector.broadcast %79 : vector<8x1xf32> to vector<8x8xf32>
    %81 = arith.mulf %76, %80 : vector<8x8xf32>
    %cst_26 = arith.constant dense<0.000000e+00> : vector<8x8xf32>
    %82 = tpu.matmul %81, %68, %cst_26 {dimension_numbers = #tpu.dot_dimension_numbers<[1], [0], [0], [1], [0, 0, 1, 1], [], []>} : vector<8x8xf32>, vector<8x8xf32>, vector<8x8xf32> -> vector<8x8xf32>
    %83 = tpu.concatenate %65, %82 in 0 : vector<8x8xf32>, vector<8x8xf32> -> vector<16x8xf32>
    %84 = vector.extract_strided_slice %7 {offsets = [0, 16], sizes = [16, 8], strides = [1, 1]} : vector<16x96xf32> to vector<16x8xf32>
    %85 = vector.extract_strided_slice %7 {offsets = [0, 48], sizes = [16, 8], strides = [1, 1]} : vector<16x96xf32> to vector<16x8xf32>
    %86 = vector.extract_strided_slice %7 {offsets = [0, 80], sizes = [16, 8], strides = [1, 1]} : vector<16x96xf32> to vector<16x8xf32>
    %87 = vector.extract_strided_slice %84 {offsets = [0, 0], sizes = [8, 8], strides = [1, 1]} : vector<16x8xf32> to vector<8x8xf32>
    %88 = vector.extract_strided_slice %85 {offsets = [0, 0], sizes = [8, 8], strides = [1, 1]} : vector<16x8xf32> to vector<8x8xf32>
    %89 = vector.extract_strided_slice %86 {offsets = [0, 0], sizes = [8, 8], strides = [1, 1]} : vector<16x8xf32> to vector<8x8xf32>
    %cst_27 = arith.constant dense<0.000000e+00> : vector<8x8xf32>
    %90 = tpu.matmul %87, %88, %cst_27 {dimension_numbers = #tpu.dot_dimension_numbers<[1], [1], [0], [0], [0, 0, 1, 0], [], []>} : vector<8x8xf32>, vector<8x8xf32>, vector<8x8xf32> -> vector<8x8xf32>
    %cst_28 = arith.constant 0.353553385 : f32
    %91 = vector.broadcast %cst_28 : f32 to vector<8x8xf32>
    %92 = arith.mulf %90, %91 : vector<8x8xf32>
    %cst_29 = arith.constant dense<0xFF800000> : vector<8xf32>
    %93 = vector.multi_reduction <maximumf>, %92, %cst_29 [1] : vector<8x8xf32> to vector<8xf32>
    %94 = vector.shape_cast %93 : vector<8xf32> to vector<8x1xf32>
    %95 = vector.broadcast %94 : vector<8x1xf32> to vector<8x8xf32>
    %96 = arith.subf %92, %95 : vector<8x8xf32>
    %97 = math.exp %96 : vector<8x8xf32>
    %cst_30 = arith.constant dense<0.000000e+00> : vector<8xf32>
    %98 = vector.multi_reduction <add>, %97, %cst_30 [1] : vector<8x8xf32> to vector<8xf32>
    %99 = vector.shape_cast %98 : vector<8xf32> to vector<8x1xf32>
    %100 = tpu.reciprocal %99 {approx = true} : vector<8x1xf32> -> vector<8x1xf32>
    %101 = vector.broadcast %100 : vector<8x1xf32> to vector<8x8xf32>
    %102 = arith.mulf %97, %101 : vector<8x8xf32>
    %cst_31 = arith.constant dense<0.000000e+00> : vector<8x8xf32>
    %103 = tpu.matmul %102, %89, %cst_31 {dimension_numbers = #tpu.dot_dimension_numbers<[1], [0], [0], [1], [0, 0, 1, 1], [], []>} : vector<8x8xf32>, vector<8x8xf32>, vector<8x8xf32> -> vector<8x8xf32>
    %104 = vector.extract_strided_slice %84 {offsets = [8, 0], sizes = [8, 8], strides = [1, 1]} : vector<16x8xf32> to vector<8x8xf32>
    %105 = vector.extract_strided_slice %85 {offsets = [8, 0], sizes = [8, 8], strides = [1, 1]} : vector<16x8xf32> to vector<8x8xf32>
    %106 = vector.extract_strided_slice %86 {offsets = [8, 0], sizes = [8, 8], strides = [1, 1]} : vector<16x8xf32> to vector<8x8xf32>
    %cst_32 = arith.constant dense<0.000000e+00> : vector<8x8xf32>
    %107 = tpu.matmul %104, %105, %cst_32 {dimension_numbers = #tpu.dot_dimension_numbers<[1], [1], [0], [0], [0, 0, 1, 0], [], []>} : vector<8x8xf32>, vector<8x8xf32>, vector<8x8xf32> -> vector<8x8xf32>
    %cst_33 = arith.constant 0.353553385 : f32
    %108 = vector.broadcast %cst_33 : f32 to vector<8x8xf32>
    %109 = arith.mulf %107, %108 : vector<8x8xf32>
    %cst_34 = arith.constant dense<0xFF800000> : vector<8xf32>
    %110 = vector.multi_reduction <maximumf>, %109, %cst_34 [1] : vector<8x8xf32> to vector<8xf32>
    %111 = vector.shape_cast %110 : vector<8xf32> to vector<8x1xf32>
    %112 = vector.broadcast %111 : vector<8x1xf32> to vector<8x8xf32>
    %113 = arith.subf %109, %112 : vector<8x8xf32>
    %114 = math.exp %113 : vector<8x8xf32>
    %cst_35 = arith.constant dense<0.000000e+00> : vector<8xf32>
    %115 = vector.multi_reduction <add>, %114, %cst_35 [1] : vector<8x8xf32> to vector<8xf32>
    %116 = vector.shape_cast %115 : vector<8xf32> to vector<8x1xf32>
    %117 = tpu.reciprocal %116 {approx = true} : vector<8x1xf32> -> vector<8x1xf32>
    %118 = vector.broadcast %117 : vector<8x1xf32> to vector<8x8xf32>
    %119 = arith.mulf %114, %118 : vector<8x8xf32>
    %cst_36 = arith.constant dense<0.000000e+00> : vector<8x8xf32>
    %120 = tpu.matmul %119, %106, %cst_36 {dimension_numbers = #tpu.dot_dimension_numbers<[1], [0], [0], [1], [0, 0, 1, 1], [], []>} : vector<8x8xf32>, vector<8x8xf32>, vector<8x8xf32> -> vector<8x8xf32>
    %121 = tpu.concatenate %103, %120 in 0 : vector<8x8xf32>, vector<8x8xf32> -> vector<16x8xf32>
    %122 = vector.extract_strided_slice %7 {offsets = [0, 24], sizes = [16, 8], strides = [1, 1]} : vector<16x96xf32> to vector<16x8xf32>
    %123 = vector.extract_strided_slice %7 {offsets = [0, 56], sizes = [16, 8], strides = [1, 1]} : vector<16x96xf32> to vector<16x8xf32>
    %124 = vector.extract_strided_slice %7 {offsets = [0, 88], sizes = [16, 8], strides = [1, 1]} : vector<16x96xf32> to vector<16x8xf32>
    %125 = vector.extract_strided_slice %122 {offsets = [0, 0], sizes = [8, 8], strides = [1, 1]} : vector<16x8xf32> to vector<8x8xf32>
    %126 = vector.extract_strided_slice %123 {offsets = [0, 0], sizes = [8, 8], strides = [1, 1]} : vector<16x8xf32> to vector<8x8xf32>
    %127 = vector.extract_strided_slice %124 {offsets = [0, 0], sizes = [8, 8], strides = [1, 1]} : vector<16x8xf32> to vector<8x8xf32>
    %cst_37 = arith.constant dense<0.000000e+00> : vector<8x8xf32>
    %128 = tpu.matmul %125, %126, %cst_37 {dimension_numbers = #tpu.dot_dimension_numbers<[1], [1], [0], [0], [0, 0, 1, 0], [], []>} : vector<8x8xf32>, vector<8x8xf32>, vector<8x8xf32> -> vector<8x8xf32>
    %cst_38 = arith.constant 0.353553385 : f32
    %129 = vector.broadcast %cst_38 : f32 to vector<8x8xf32>
    %130 = arith.mulf %128, %129 : vector<8x8xf32>
    %cst_39 = arith.constant dense<0xFF800000> : vector<8xf32>
    %131 = vector.multi_reduction <maximumf>, %130, %cst_39 [1] : vector<8x8xf32> to vector<8xf32>
    %132 = vector.shape_cast %131 : vector<8xf32> to vector<8x1xf32>
    %133 = vector.broadcast %132 : vector<8x1xf32> to vector<8x8xf32>
    %134 = arith.subf %130, %133 : vector<8x8xf32>
    %135 = math.exp %134 : vector<8x8xf32>
    %cst_40 = arith.constant dense<0.000000e+00> : vector<8xf32>
    %136 = vector.multi_reduction <add>, %135, %cst_40 [1] : vector<8x8xf32> to vector<8xf32>
    %137 = vector.shape_cast %136 : vector<8xf32> to vector<8x1xf32>
    %138 = tpu.reciprocal %137 {approx = true} : vector<8x1xf32> -> vector<8x1xf32>
    %139 = vector.broadcast %138 : vector<8x1xf32> to vector<8x8xf32>
    %140 = arith.mulf %135, %139 : vector<8x8xf32>
    %cst_41 = arith.constant dense<0.000000e+00> : vector<8x8xf32>
    %141 = tpu.matmul %140, %127, %cst_41 {dimension_numbers = #tpu.dot_dimension_numbers<[1], [0], [0], [1], [0, 0, 1, 1], [], []>} : vector<8x8xf32>, vector<8x8xf32>, vector<8x8xf32> -> vector<8x8xf32>
    %142 = vector.extract_strided_slice %122 {offsets = [8, 0], sizes = [8, 8], strides = [1, 1]} : vector<16x8xf32> to vector<8x8xf32>
    %143 = vector.extract_strided_slice %123 {offsets = [8, 0], sizes = [8, 8], strides = [1, 1]} : vector<16x8xf32> to vector<8x8xf32>
    %144 = vector.extract_strided_slice %124 {offsets = [8, 0], sizes = [8, 8], strides = [1, 1]} : vector<16x8xf32> to vector<8x8xf32>
    %cst_42 = arith.constant dense<0.000000e+00> : vector<8x8xf32>
    %145 = tpu.matmul %142, %143, %cst_42 {dimension_numbers = #tpu.dot_dimension_numbers<[1], [1], [0], [0], [0, 0, 1, 0], [], []>} : vector<8x8xf32>, vector<8x8xf32>, vector<8x8xf32> -> vector<8x8xf32>
    %cst_43 = arith.constant 0.353553385 : f32
    %146 = vector.broadcast %cst_43 : f32 to vector<8x8xf32>
    %147 = arith.mulf %145, %146 : vector<8x8xf32>
    %cst_44 = arith.constant dense<0xFF800000> : vector<8xf32>
    %148 = vector.multi_reduction <maximumf>, %147, %cst_44 [1] : vector<8x8xf32> to vector<8xf32>
    %149 = vector.shape_cast %148 : vector<8xf32> to vector<8x1xf32>
    %150 = vector.broadcast %149 : vector<8x1xf32> to vector<8x8xf32>
    %151 = arith.subf %147, %150 : vector<8x8xf32>
    %152 = math.exp %151 : vector<8x8xf32>
    %cst_45 = arith.constant dense<0.000000e+00> : vector<8xf32>
    %153 = vector.multi_reduction <add>, %152, %cst_45 [1] : vector<8x8xf32> to vector<8xf32>
    %154 = vector.shape_cast %153 : vector<8xf32> to vector<8x1xf32>
    %155 = tpu.reciprocal %154 {approx = true} : vector<8x1xf32> -> vector<8x1xf32>
    %156 = vector.broadcast %155 : vector<8x1xf32> to vector<8x8xf32>
    %157 = arith.mulf %152, %156 : vector<8x8xf32>
    %cst_46 = arith.constant dense<0.000000e+00> : vector<8x8xf32>
    %158 = tpu.matmul %157, %144, %cst_46 {dimension_numbers = #tpu.dot_dimension_numbers<[1], [0], [0], [1], [0, 0, 1, 1], [], []>} : vector<8x8xf32>, vector<8x8xf32>, vector<8x8xf32> -> vector<8x8xf32>
    %159 = tpu.concatenate %141, %158 in 0 : vector<8x8xf32>, vector<8x8xf32> -> vector<16x8xf32>
    %160 = tpu.concatenate %45, %83, %121, %159 in 1 : vector<16x8xf32>, vector<16x8xf32>, vector<16x8xf32>, vector<16x8xf32> -> vector<16x32xf32>
    %cst_47 = arith.constant dense<0.000000e+00> : vector<16x32xf32>
    %161 = tpu.matmul %160, %2, %cst_47 {dimension_numbers = #tpu.dot_dimension_numbers<[1], [0], [0], [1], [0, 0, 1, 1], [], []>} : vector<16x32xf32>, vector<32x32xf32>, vector<16x32xf32> -> vector<16x32xf32>
    %162 = vector.broadcast %4 : vector<1x32xf32> to vector<16x32xf32>
    %163 = arith.addf %161, %162 : vector<16x32xf32>
    %cst_48 = arith.constant 5.000000e-01 : f32
    %164 = vector.broadcast %cst_48 : f32 to vector<16x32xf32>
    %165 = arith.mulf %164, %0 : vector<16x32xf32>
    %166 = arith.addf %163, %165 : vector<16x32xf32>
    %cst_49 = arith.constant dense<0.000000e+00> : vector<16xf32>
    %167 = vector.multi_reduction <add>, %166, %cst_49 [1] : vector<16x32xf32> to vector<16xf32>
    %168 = vector.shape_cast %167 : vector<16xf32> to vector<16x1xf32>
    %cst_50 = arith.constant 3.200000e+01 : f32
    %169 = vector.broadcast %cst_50 : f32 to vector<16x1xf32>
    %170 = arith.divf %168, %169 : vector<16x1xf32>
    %171 = vector.broadcast %170 : vector<16x1xf32> to vector<16x32xf32>
    %172 = arith.subf %166, %171 : vector<16x32xf32>
    %173 = arith.mulf %172, %172 : vector<16x32xf32>
    %cst_51 = arith.constant dense<0.000000e+00> : vector<16xf32>
    %174 = vector.multi_reduction <add>, %173, %cst_51 [1] : vector<16x32xf32> to vector<16xf32>
    %175 = vector.shape_cast %174 : vector<16xf32> to vector<16x1xf32>
    %cst_52 = arith.constant 3.200000e+01 : f32
    %176 = vector.broadcast %cst_52 : f32 to vector<16x1xf32>
    %177 = arith.divf %175, %176 : vector<16x1xf32>
    %178 = vector.broadcast %170 : vector<16x1xf32> to vector<16x32xf32>
    %179 = arith.subf %166, %178 : vector<16x32xf32>
    %cst_53 = arith.constant 9.99999974E-6 : f32
    %180 = vector.broadcast %cst_53 : f32 to vector<16x1xf32>
    %181 = arith.addf %177, %180 : vector<16x1xf32>
    %182 = math.rsqrt %181 : vector<16x1xf32>
    %183 = vector.broadcast %182 : vector<16x1xf32> to vector<16x32xf32>
    %184 = arith.mulf %179, %183 : vector<16x32xf32>
    %185 = vector.broadcast %5 : vector<1x32xf32> to vector<16x32xf32>
    %186 = arith.mulf %184, %185 : vector<16x32xf32>
    %187 = vector.broadcast %6 : vector<1x32xf32> to vector<16x32xf32>
    %188 = arith.addf %186, %187 : vector<16x32xf32>
    %c0_54 = arith.constant 0 : index
    %c0_55 = arith.constant 0 : index
    %189 = vector.load %arg5[%c0_54, %c0_55] : memref<16x32xf32, #tpu.memory_space<vmem>>, vector<16x32xf32>
    tpu.vector_store %arg5[%c0_54, %c0_55], %188 {strides = array<i32>} : memref<16x32xf32, #tpu.memory_space<vmem>>, vector<16x32xf32>,
    return
  }
  func.func @transform_0(%arg0: i32) -> (i32, i32) {
    %c0_i32 = arith.constant 0 : i32
    %c0_i32_0 = arith.constant 0 : i32
    %c0_i32_1 = arith.constant 0 : i32
    return %c0_i32, %c0_i32_0 : i32, i32
  }
  func.func @transform_1(%arg0: i32) -> (i32, i32) {
    %c0_i32 = arith.constant 0 : i32
    %c0_i32_0 = arith.constant 0 : i32
    %c0_i32_1 = arith.constant 0 : i32
    return %c0_i32, %c0_i32_0 : i32, i32
  }
  func.func @transform_2(%arg0: i32) -> (i32, i32) {
    %c0_i32 = arith.constant 0 : i32
    %c0_i32_0 = arith.constant 0 : i32
    %c0_i32_1 = arith.constant 0 : i32
    return %c0_i32, %c0_i32_0 : i32, i32
  }
  func.func @transform_3(%arg0: i32) -> (i32, i32) {
    %c0_i32 = arith.constant 0 : i32
    %c0_i32_0 = arith.constant 0 : i32
    %c0_i32_1 = arith.constant 0 : i32
    return %c0_i32, %c0_i32_0 : i32, i32
  }
  func.func @transform_4(%arg0: i32) -> (i32, i32) {
    %c0_i32 = arith.constant 0 : i32
    %c0_i32_0 = arith.constant 0 : i32
    %c0_i32_1 = arith.constant 0 : i32
    return %c0_i32, %c0_i32_0 : i32, i32
  }
}

</mosaic_0001>

<llo_original>
// kernel: postln_attn_block.1
$region0: #{postln_attn_block.1}
  #allocation0 [shape = 'u32[]', space=smem, size = 0x4, offset = 0x4, fixed_abs, tag = 'smem constant byte address 0x4 - core index']
  #allocation1 [shape = 'u32[144,128]{1,0:T(1,128)}', space=vmem, size = 0x12000, scoped, tag = 'internal scratch']
  %s0 = inlined_call_operand.hbm [shape: f32[16,32], index: 0, kind: input, shape index: {}]
  %s1 = inlined_call_operand.hbm [shape: f32[32,96], index: 1, kind: input, shape index: {}]
  %s2 = inlined_call_operand.hbm [shape: f32[32,32], index: 2, kind: input, shape index: {}]
  %s3 = inlined_call_operand.vmem [shape: f32[3,32], index: 3, kind: input, shape index: {}]
  %s4 = inlined_call_operand.hbm [shape: f32[16,32], index: 4, kind: output, shape index: {}]
  %s5 = sld [smem:[#allocation0]]
  $region38: #{postln_attn_block.1} parent=0
    _
  %s7 = ssub.s32 1, %s5
  %s8 = scalar_select 0, %s7, %s5
  $region1: #{postln_attn_block.1} parent=0
    #allocation2 [shape = 'u8[8192]{0}', space=vmem, size = 0x2000, scoped, tag = 'input window, operand 0, single buffered']
    #allocation3 [shape = 's32[1]{0}', space=sflag, size = 0x4, scoped, tag = 'scoped memory for postln_attn_block.1']
    #allocation4 [shape = 's32[1]{0}', space=sflag, size = 0x4, scoped, tag = 'scoped memory for postln_attn_block.1']
    #allocation5 [shape = 'u8[16384]{0}', space=vmem, size = 0x4000, scoped, tag = 'input window, operand 1, single buffered']
    #allocation6 [shape = 's32[1]{0}', space=sflag, size = 0x4, scoped, tag = 'scoped memory for postln_attn_block.1']
    #allocation7 [shape = 'u8[16384]{0}', space=vmem, size = 0x4000, scoped, tag = 'input window, operand 2, single buffered']
    #allocation8 [shape = 'u8[8192]{0}', space=vmem, size = 0x2000, scoped, tag = 'output window, operand 0, single buffered']
    %9 = vsyncpa [#allocation3], 0
    %10 = vsyncpa [#allocation6], 0
    %11 = vsyncpa [#allocation4], 0
    // Predicated region
    $region2: #{postln_attn_block.1} parent=1 // pred_check
      _
    $region3: #{postln_attn_block.1} parent=1 // pred_check_branch
      %13 = sbr.rel (0) target = $region5
    $region4: #{postln_attn_block.1} parent=1 // pred_region
      %s15 = ssub.s32 256, 256
      %16 = vsyncadd [#allocation3], %s15
      %s17 = sshll.u32 [#allocation2], 4
      %s18 = int_to_ptr.vmem [resolvable:$true] %s17
      %23 = dma.hbm_to_vmem [thread:$0]  %s0, 256, %s18, [#allocation3], 128, 128, 8
    $region5: #{postln_attn_block.1} parent=1 // pred_fallthru
      _
    // Predicated region
    $region6: #{postln_attn_block.1} parent=1 // pred_check
      _
    $region7: #{postln_attn_block.1} parent=1 // pred_check_branch
      %25 = sbr.rel (0) target = $region9
    $region8: #{postln_attn_block.1} parent=1 // pred_region
      %s27 = ssub.s32 512, 512
      %28 = vsyncadd [#allocation6], %s27
      %s29 = sshll.u32 [#allocation5], 4
      %s30 = int_to_ptr.vmem [resolvable:$true] %s29
      %35 = dma.hbm_to_vmem [thread:$0]  %s1, 512, %s30, [#allocation6], 128, 128, 8
    $region9: #{postln_attn_block.1} parent=1 // pred_fallthru
      _
    // Predicated region
    $region10: #{postln_attn_block.1} parent=1 // pred_check
      _
    $region11: #{postln_attn_block.1} parent=1 // pred_check_branch
      %37 = sbr.rel (0) target = $region13
    $region12: #{postln_attn_block.1} parent=1 // pred_region
      %s39 = ssub.s32 512, 512
      %40 = vsyncadd [#allocation6], %s39
      %s41 = sshll.u32 [#allocation7], 4
      %s42 = int_to_ptr.vmem [resolvable:$true] %s41
      %47 = dma.hbm_to_vmem [thread:$0]  %s2, 512, %s42, [#allocation6], 128, 128, 8
    $region13: #{postln_attn_block.1} parent=1 // pred_fallthru
      _
    // Predicated region
    $region14: #{postln_attn_block.1} parent=1 // pred_check
      _
    $region15: #{postln_attn_block.1} parent=1 // pred_check_branch
      %49 = sbr.rel (0) target = $region17
    $region16: #{postln_attn_block.1} parent=1 // pred_region
      _
    $region17: #{postln_attn_block.1} parent=1 // pred_fallthru
      _
    // Predicated region
    $region18: #{postln_attn_block.1} parent=1 // pred_check
      _
    $region19: #{postln_attn_block.1} parent=1 // pred_check_branch
      %51 = sbr.rel (0) target = $region21
    $region20: #{postln_attn_block.1} parent=1 // pred_region
      %52 = dma.done [#allocation3], 256
    $region21: #{postln_attn_block.1} parent=1 // pred_fallthru
      _
    // Predicated region
    $region22: #{postln_attn_block.1} parent=1 // pred_check
      _
    $region23: #{postln_attn_block.1} parent=1 // pred_check_branch
      %54 = sbr.rel (0) target = $region25
    $region24: #{postln_attn_block.1} parent=1 // pred_region
      %55 = dma.done [#allocation6], 512
    $region25: #{postln_attn_block.1} parent=1 // pred_fallthru
      _
    // Predicated region
    $region26: #{postln_attn_block.1} parent=1 // pred_check
      _
    $region27: #{postln_attn_block.1} parent=1 // pred_check_branch
      %57 = sbr.rel (0) target = $region29
    $region28: #{postln_attn_block.1} parent=1 // pred_region
      %58 = dma.done [#allocation6], 512
    $region29: #{postln_attn_block.1} parent=1 // pred_fallthru
      _
    %v59 = vld [vmem:[#allocation2] sm:$0xff]
    %v60 = vld [vmem:[#allocation2 + $0x8] sm:$0xff]
    %v61 = vld [vmem:[#allocation5] sm:$0xff]
    %v62 = vld [vmem:[#allocation5 + $0x8] sm:$0xff]
    %v63 = vld [vmem:[#allocation5 + $0x10] sm:$0xff]
    %v64 = vld [vmem:[#allocation5 + $0x18] sm:$0xff]
    %v65 = vld [vmem:[#allocation7] sm:$0xff]
    %v66 = vld [vmem:[#allocation7 + $0x8] sm:$0xff]
    %v67 = vld [vmem:[#allocation7 + $0x10] sm:$0xff]
    %v68 = vld [vmem:[#allocation7 + $0x18] sm:$0xff]
    %v69 = vld [vmem:[%s3] sm:$0x7]
    %vm70 = vcmask 261120
    %v72 = vsel %vm70, %v59, 0
    %v75 = vsel %vm70, %v60, 0
    %77 = vmatprep.subr.mxu0 0.0
    %78 = vmatpush1.msra.mxu0 %v61
    %79 = vmatprep.subr.mxu0 0.0
    %80 = vmatpush1.msra.mxu0 %v62
    %81 = vmatprep.subr.mxu0 0.0
    %82 = vmatpush1.msra.mxu0 %v63
    %83 = vmatprep.subr.mxu0 0.0
    %84 = vmatpush1.msra.mxu0 %v64
    %85 = vmatprep.subr.mxu0 0.0
    %86 = vmatpush1.msra.mxu0 0.0
    %87 = vmatprep.subr.mxu0 0.0
    %88 = vmatpush1.msra.mxu0 0.0
    %89 = vmatprep.subr.mxu0 0.0
    %90 = vmatpush1.msra.mxu0 0.0
    %91 = vmatprep.subr.mxu0 0.0
    %92 = vmatpush1.msra.mxu0 0.0
    %93 = vmatprep.subr.mxu0 0.0
    %94 = vmatpush1.msra.mxu0 0.0
    %95 = vmatprep.subr.mxu0 0.0
    %96 = vmatpush1.msra.mxu0 0.0
    %97 = vmatprep.subr.mxu0 0.0
    %98 = vmatpush1.msra.mxu0 0.0
    %99 = vmatprep.subr.mxu0 0.0
    %100 = vmatpush1.msra.mxu0 0.0
    %101 = vmatprep.subr.mxu0 0.0
    %102 = vmatpush1.msra.mxu0 0.0
    %103 = vmatprep.subr.mxu0 0.0
    %104 = vmatpush1.msra.mxu0 0.0
    %105 = vmatprep.subr.mxu0 0.0
    %106 = vmatpush1.msra.mxu0 0.0
    %107 = vmatprep.subr.mxu0 0.0
    %108 = vmatpush1.msra.mxu0 0.0
    %109 = vmatprep.subr.mxu0 0.0
    %110 = vmatpush1.msra.mxu0 0.0
    %111 = vmatprep.subr.mxu0 0.0
    %112 = vmatpush1.msra.mxu0 0.0
    %113 = vmatprep.subr.mxu0 0.0
    %114 = vmatpush1.msra.mxu0 0.0
    %115 = vmatprep.subr.mxu0 0.0
    %116 = vmatpush1.msra.mxu0 0.0
    %117 = vmatprep.subr.mxu0 0.0
    %118 = vmatpush1.msra.mxu0 0.0
    %119 = vmatprep.subr.mxu0 0.0
    %120 = vmatpush1.msra.mxu0 0.0
    %121 = vmatprep.subr.mxu0 0.0
    %122 = vmatpush1.msra.mxu0 0.0
    %123 = vmatprep.subr.mxu0 0.0
    %124 = vmatpush1.msra.mxu0 0.0
    %125 = vmatprep.subr.mxu0 0.0
    %126 = vmatpush1.msra.mxu0 0.0
    %127 = vmatprep.subr.mxu0 0.0
    %128 = vmatpush1.msra.mxu0 0.0
    %129 = vmatprep.subr.mxu0 0.0
    %130 = vmatpush1.msra.mxu0 0.0
    %131 = vmatprep.subr.mxu0 0.0
    %132 = vmatpush1.msra.mxu0 0.0
    %133 = vmatprep.subr.mxu0 0.0
    %134 = vmatpush1.msra.mxu0 0.0
    %135 = vmatprep.subr.mxu0 0.0
    %136 = vmatpush1.msra.mxu0 0.0
    %137 = vmatprep.subr.mxu0 0.0
    %138 = vmatpush1.msra.mxu0 0.0
    %139 = vmatprep.subr.mxu0 0.0
    %140 = vmatpush1.msra.mxu0 0.0
    %141 = vmatprep.mubr.f32.mxu0 0.0
    %142 = vmatmul.mubr.f32.gmra.mrb[0].mxu0 %v72
    %v143 = vpop.f32.mrb[0].mxu0
    %v144 = vadd.f32 0.0, %v143
    %v145 = vpop.f32.mrb[0].mxu0
    %146 = vmatprep.mubr.f32.mxu0 0.0
    %147 = vmatmul.mubr.f32.gmra.mrb[0].mxu0 %v75
    %v148 = vpop.f32.mrb[0].mxu0
    %v149 = vadd.f32 0.0, %v148
    %v150 = vpop.f32.mrb[0].mxu0
    %151 = vdwg.mxu0
    %153 = vrot.lane.b32.xlu0 %v144, 96
    %v154 = vpop.permute.xlu0 %153
    %vm155 = vcmask 64512
    %v156 = vsel %vm155, %v144, 0
    %v158 = vsel %vm155, %v154, 0
    %160 = vmatprep.subr.mxu0 0.0
    %161 = vmatpush1.xpose.msra.mxu0 %v158
    %162 = vmatprep.subr.mxu0 0.0
    %163 = vmatpush1.xpose.msra.mxu0 0.0
    %164 = vmatprep.subr.mxu0 0.0
    %165 = vmatpush1.xpose.msra.mxu0 0.0
    %166 = vmatprep.subr.mxu0 0.0
    %167 = vmatpush1.xpose.msra.mxu0 0.0
    %168 = vmatprep.subr.mxu0 0.0
    %169 = vmatpush1.xpose.msra.mxu0 0.0
    %170 = vmatprep.subr.mxu0 0.0
    %171 = vmatpush1.xpose.msra.mxu0 0.0
    %172 = vmatprep.subr.mxu0 0.0
    %173 = vmatpush1.xpose.msra.mxu0 0.0
    %174 = vmatprep.subr.mxu0 0.0
    %175 = vmatpush1.xpose.msra.mxu0 0.0
    %176 = vmatprep.subr.mxu0 0.0
    %177 = vmatpush1.xpose.msra.mxu0 0.0
    %178 = vmatprep.subr.mxu0 0.0
    %179 = vmatpush1.xpose.msra.mxu0 0.0
    %180 = vmatprep.subr.mxu0 0.0
    %181 = vmatpush1.xpose.msra.mxu0 0.0
    %182 = vmatprep.subr.mxu0 0.0
    %183 = vmatpush1.xpose.msra.mxu0 0.0
    %184 = vmatprep.subr.mxu0 0.0
    %185 = vmatpush1.xpose.msra.mxu0 0.0
    %186 = vmatprep.subr.mxu0 0.0
    %187 = vmatpush1.xpose.msra.mxu0 0.0
    %188 = vmatprep.subr.mxu0 0.0
    %189 = vmatpush1.xpose.msra.mxu0 0.0
    %190 = vmatprep.subr.mxu0 0.0
    %191 = vmatpush1.xpose.msra.mxu0 0.0
    %192 = vmatprep.subr.mxu0 0.0
    %193 = vmatpush1.xpose.msra.mxu0 0.0
    %194 = vmatprep.subr.mxu0 0.0
    %195 = vmatpush1.xpose.msra.mxu0 0.0
    %196 = vmatprep.subr.mxu0 0.0
    %197 = vmatpush1.xpose.msra.mxu0 0.0
    %198 = vmatprep.subr.mxu0 0.0
    %199 = vmatpush1.xpose.msra.mxu0 0.0
    %200 = vmatprep.subr.mxu0 0.0
    %201 = vmatpush1.xpose.msra.mxu0 0.0
    %202 = vmatprep.subr.mxu0 0.0
    %203 = vmatpush1.xpose.msra.mxu0 0.0
    %204 = vmatprep.subr.mxu0 0.0
    %205 = vmatpush1.xpose.msra.mxu0 0.0
    %206 = vmatprep.subr.mxu0 0.0
    %207 = vmatpush1.xpose.msra.mxu0 0.0
    %208 = vmatprep.subr.mxu0 0.0
    %209 = vmatpush1.xpose.msra.mxu0 0.0
    %210 = vmatprep.subr.mxu0 0.0
    %211 = vmatpush1.xpose.msra.mxu0 0.0
    %212 = vmatprep.subr.mxu0 0.0
    %213 = vmatpush1.xpose.msra.mxu0 0.0
    %214 = vmatprep.subr.mxu0 0.0
    %215 = vmatpush1.xpose.msra.mxu0 0.0
    %216 = vmatprep.subr.mxu0 0.0
    %217 = vmatpush1.xpose.msra.mxu0 0.0
    %218 = vmatprep.subr.mxu0 0.0
    %219 = vmatpush1.xpose.msra.mxu0 0.0
    %220 = vmatprep.subr.mxu0 0.0
    %221 = vmatpush1.xpose.msra.mxu0 0.0
    %222 = vmatprep.subr.mxu0 0.0
    %223 = vmatpush1.xpose.msra.mxu0 0.0
    %224 = vmatprep.mubr.f32.mxu0 0.0
    %225 = vmatmul.mubr.f32.gmra.mrb[0].mxu0 %v156
    %v226 = vpop.f32.mrb[0].mxu0
    %v227 = vadd.f32 0.0, %v226
    %v228 = vpop.f32.mrb[0].mxu0
    %229 = vdwg.mxu0
    %v230 = vmul.f32 %v227, 0.35355338
    %v231 = vsel %vm155, %v230, -inf
    %232 = vmax.xlane.f32.xlu0 %v231
    %v233 = vpop.xlane.xlu0 %232
    %v234 = vsub.f32 %v230, %v233
    %v235 = vmul.f32 %v234, 1.442695
    %v236 = vpow.pop %v235
    %v237 = vsel %vm155, %v236, 0.0
    %238 = vadd.xlane.f32.xlu0 %v237
    %v239 = vpop.xlane.xlu0 %238
    %v240 = vrcp.pop %v239
    %v241 = vmul.f32 %v236, %v240
    %242 = vrot.lane.b32.xlu0 %v144, 64
    %v243 = vpop.permute.xlu0 %242
    %v246 = vsel %vm155, %v241, 0
    %248 = vmatprep.subr.mxu0 0.0
    %249 = vmatpush1.msra.mxu0 %v243
    %250 = vmatprep.subr.mxu0 0.0
    %251 = vmatpush1.msra.mxu0 0.0
    %252 = vmatprep.subr.mxu0 0.0
    %253 = vmatpush1.msra.mxu0 0.0
    %254 = vmatprep.subr.mxu0 0.0
    %255 = vmatpush1.msra.mxu0 0.0
    %256 = vmatprep.subr.mxu0 0.0
    %257 = vmatpush1.msra.mxu0 0.0
    %258 = vmatprep.subr.mxu0 0.0
    %259 = vmatpush1.msra.mxu0 0.0
    %260 = vmatprep.subr.mxu0 0.0
    %261 = vmatpush1.msra.mxu0 0.0
    %262 = vmatprep.subr.mxu0 0.0
    %263 = vmatpush1.msra.mxu0 0.0
    %264 = vmatprep.subr.mxu0 0.0
    %265 = vmatpush1.msra.mxu0 0.0
    %266 = vmatprep.subr.mxu0 0.0
    %267 = vmatpush1.msra.mxu0 0.0
    %268 = vmatprep.subr.mxu0 0.0
    %269 = vmatpush1.msra.mxu0 0.0
    %270 = vmatprep.subr.mxu0 0.0
    %271 = vmatpush1.msra.mxu0 0.0
    %272 = vmatprep.subr.mxu0 0.0
    %273 = vmatpush1.msra.mxu0 0.0
    %274 = vmatprep.subr.mxu0 0.0
    %275 = vmatpush1.msra.mxu0 0.0
    %276 = vmatprep.subr.mxu0 0.0
    %277 = vmatpush1.msra.mxu0 0.0
    %278 = vmatprep.subr.mxu0 0.0
    %279 = vmatpush1.msra.mxu0 0.0
    %280 = vmatprep.subr.mxu0 0.0
    %281 = vmatpush1.msra.mxu0 0.0
    %282 = vmatprep.subr.mxu0 0.0
    %283 = vmatpush1.msra.mxu0 0.0
    %284 = vmatprep.subr.mxu0 0.0
    %285 = vmatpush1.msra.mxu0 0.0
    %286 = vmatprep.subr.mxu0 0.0
    %287 = vmatpush1.msra.mxu0 0.0
    %288 = vmatprep.subr.mxu0 0.0
    %289 = vmatpush1.msra.mxu0 0.0
    %290 = vmatprep.subr.mxu0 0.0
    %291 = vmatpush1.msra.mxu0 0.0
    %292 = vmatprep.subr.mxu0 0.0
    %293 = vmatpush1.msra.mxu0 0.0
    %294 = vmatprep.subr.mxu0 0.0
    %295 = vmatpush1.msra.mxu0 0.0
    %296 = vmatprep.subr.mxu0 0.0
    %297 = vmatpush1.msra.mxu0 0.0
    %298 = vmatprep.subr.mxu0 0.0
    %299 = vmatpush1.msra.mxu0 0.0
    %300 = vmatprep.subr.mxu0 0.0
    %301 = vmatpush1.msra.mxu0 0.0
    %302 = vmatprep.subr.mxu0 0.0
    %303 = vmatpush1.msra.mxu0 0.0
    %304 = vmatprep.subr.mxu0 0.0
    %305 = vmatpush1.msra.mxu0 0.0
    %306 = vmatprep.subr.mxu0 0.0
    %307 = vmatpush1.msra.mxu0 0.0
    %308 = vmatprep.subr.mxu0 0.0
    %309 = vmatpush1.msra.mxu0 0.0
    %310 = vmatprep.subr.mxu0 0.0
    %311 = vmatpush1.msra.mxu0 0.0
    %312 = vmatprep.mubr.f32.mxu0 0.0
    %313 = vmatmul.mubr.f32.gmra.mrb[0].mxu0 %v246
    %v314 = vpop.f32.mrb[0].mxu0
    %v315 = vadd.f32 0.0, %v314
    %v316 = vpop.f32.mrb[0].mxu0
    %317 = vdwg.mxu0
    %319 = vrot.lane.b32.xlu0 %v149, 96
    %v320 = vpop.permute.xlu0 %319
    %v321 = vsel %vm155, %v149, 0
    %v323 = vsel %vm155, %v320, 0
    %325 = vmatprep.subr.mxu0 0.0
    %326 = vmatpush1.xpose.msra.mxu0 %v323
    %327 = vmatprep.subr.mxu0 0.0
    %328 = vmatpush1.xpose.msra.mxu0 0.0
    %329 = vmatprep.subr.mxu0 0.0
    %330 = vmatpush1.xpose.msra.mxu0 0.0
    %331 = vmatprep.subr.mxu0 0.0
    %332 = vmatpush1.xpose.msra.mxu0 0.0
    %333 = vmatprep.subr.mxu0 0.0
    %334 = vmatpush1.xpose.msra.mxu0 0.0
    %335 = vmatprep.subr.mxu0 0.0
    %336 = vmatpush1.xpose.msra.mxu0 0.0
    %337 = vmatprep.subr.mxu0 0.0
    %338 = vmatpush1.xpose.msra.mxu0 0.0
    %339 = vmatprep.subr.mxu0 0.0
    %340 = vmatpush1.xpose.msra.mxu0 0.0
    %341 = vmatprep.subr.mxu0 0.0
    %342 = vmatpush1.xpose.msra.mxu0 0.0
    %343 = vmatprep.subr.mxu0 0.0
    %344 = vmatpush1.xpose.msra.mxu0 0.0
    %345 = vmatprep.subr.mxu0 0.0
    %346 = vmatpush1.xpose.msra.mxu0 0.0
    %347 = vmatprep.subr.mxu0 0.0
    %348 = vmatpush1.xpose.msra.mxu0 0.0
    %349 = vmatprep.subr.mxu0 0.0
    %350 = vmatpush1.xpose.msra.mxu0 0.0
    %351 = vmatprep.subr.mxu0 0.0
    %352 = vmatpush1.xpose.msra.mxu0 0.0
    %353 = vmatprep.subr.mxu0 0.0
    %354 = vmatpush1.xpose.msra.mxu0 0.0
    %355 = vmatprep.subr.mxu0 0.0
    %356 = vmatpush1.xpose.msra.mxu0 0.0
    %357 = vmatprep.subr.mxu0 0.0
    %358 = vmatpush1.xpose.msra.mxu0 0.0
    %359 = vmatprep.subr.mxu0 0.0
    %360 = vmatpush1.xpose.msra.mxu0 0.0
    %361 = vmatprep.subr.mxu0 0.0
    %362 = vmatpush1.xpose.msra.mxu0 0.0
    %363 = vmatprep.subr.mxu0 0.0
    %364 = vmatpush1.xpose.msra.mxu0 0.0
    %365 = vmatprep.subr.mxu0 0.0
    %366 = vmatpush1.xpose.msra.mxu0 0.0
    %367 = vmatprep.subr.mxu0 0.0
    %368 = vmatpush1.xpose.msra.mxu0 0.0
    %369 = vmatprep.subr.mxu0 0.0
    %370 = vmatpush1.xpose.msra.mxu0 0.0
    %371 = vmatprep.subr.mxu0 0.0
    %372 = vmatpush1.xpose.msra.mxu0 0.0
    %373 = vmatprep.subr.mxu0 0.0
    %374 = vmatpush1.xpose.msra.mxu0 0.0
    %375 = vmatprep.subr.mxu0 0.0
    %376 = vmatpush1.xpose.msra.mxu0 0.0
    %377 = vmatprep.subr.mxu0 0.0
    %378 = vmatpush1.xpose.msra.mxu0 0.0
    %379 = vmatprep.subr.mxu0 0.0
    %380 = vmatpush1.xpose.msra.mxu0 0.0
    %381 = vmatprep.subr.mxu0 0.0
    %382 = vmatpush1.xpose.msra.mxu0 0.0
    %383 = vmatprep.subr.mxu0 0.0
    %384 = vmatpush1.xpose.msra.mxu0 0.0
    %385 = vmatprep.subr.mxu0 0.0
    %386 = vmatpush1.xpose.msra.mxu0 0.0
    %387 = vmatprep.subr.mxu0 0.0
    %388 = vmatpush1.xpose.msra.mxu0 0.0
    %389 = vmatprep.mubr.f32.mxu0 0.0
    %390 = vmatmul.mubr.f32.gmra.mrb[0].mxu0 %v321
    %v391 = vpop.f32.mrb[0].mxu0
    %v392 = vadd.f32 0.0, %v391
    %v393 = vpop.f32.mrb[0].mxu0
    %394 = vdwg.mxu0
    %v395 = vmul.f32 %v392, 0.35355338
    %v396 = vsel %vm155, %v395, -inf
    %397 = vmax.xlane.f32.xlu0 %v396
    %v398 = vpop.xlane.xlu0 %397
    %v399 = vsub.f32 %v395, %v398
    %v400 = vmul.f32 %v399, 1.442695
    %v401 = vpow.pop %v400
    %v402 = vsel %vm155, %v401, 0.0
    %403 = vadd.xlane.f32.xlu0 %v402
    %v404 = vpop.xlane.xlu0 %403
    %v405 = vrcp.pop %v404
    %v406 = vmul.f32 %v401, %v405
    %407 = vrot.lane.b32.xlu0 %v149, 64
    %v408 = vpop.permute.xlu0 %407
    %v411 = vsel %vm155, %v406, 0
    %413 = vmatprep.subr.mxu0 0.0
    %414 = vmatpush1.msra.mxu0 %v408
    %415 = vmatprep.subr.mxu0 0.0
    %416 = vmatpush1.msra.mxu0 0.0
    %417 = vmatprep.subr.mxu0 0.0
    %418 = vmatpush1.msra.mxu0 0.0
    %419 = vmatprep.subr.mxu0 0.0
    %420 = vmatpush1.msra.mxu0 0.0
    %421 = vmatprep.subr.mxu0 0.0
    %422 = vmatpush1.msra.mxu0 0.0
    %423 = vmatprep.subr.mxu0 0.0
    %424 = vmatpush1.msra.mxu0 0.0
    %425 = vmatprep.subr.mxu0 0.0
    %426 = vmatpush1.msra.mxu0 0.0
    %427 = vmatprep.subr.mxu0 0.0
    %428 = vmatpush1.msra.mxu0 0.0
    %429 = vmatprep.subr.mxu0 0.0
    %430 = vmatpush1.msra.mxu0 0.0
    %431 = vmatprep.subr.mxu0 0.0
    %432 = vmatpush1.msra.mxu0 0.0
    %433 = vmatprep.subr.mxu0 0.0
    %434 = vmatpush1.msra.mxu0 0.0
    %435 = vmatprep.subr.mxu0 0.0
    %436 = vmatpush1.msra.mxu0 0.0
    %437 = vmatprep.subr.mxu0 0.0
    %438 = vmatpush1.msra.mxu0 0.0
    %439 = vmatprep.subr.mxu0 0.0
    %440 = vmatpush1.msra.mxu0 0.0
    %441 = vmatprep.subr.mxu0 0.0
    %442 = vmatpush1.msra.mxu0 0.0
    %443 = vmatprep.subr.mxu0 0.0
    %444 = vmatpush1.msra.mxu0 0.0
    %445 = vmatprep.subr.mxu0 0.0
    %446 = vmatpush1.msra.mxu0 0.0
    %447 = vmatprep.subr.mxu0 0.0
    %448 = vmatpush1.msra.mxu0 0.0
    %449 = vmatprep.subr.mxu0 0.0
    %450 = vmatpush1.msra.mxu0 0.0
    %451 = vmatprep.subr.mxu0 0.0
    %452 = vmatpush1.msra.mxu0 0.0
    %453 = vmatprep.subr.mxu0 0.0
    %454 = vmatpush1.msra.mxu0 0.0
    %455 = vmatprep.subr.mxu0 0.0
    %456 = vmatpush1.msra.mxu0 0.0
    %457 = vmatprep.subr.mxu0 0.0
    %458 = vmatpush1.msra.mxu0 0.0
    %459 = vmatprep.subr.mxu0 0.0
    %460 = vmatpush1.msra.mxu0 0.0
    %461 = vmatprep.subr.mxu0 0.0
    %462 = vmatpush1.msra.mxu0 0.0
    %463 = vmatprep.subr.mxu0 0.0
    %464 = vmatpush1.msra.mxu0 0.0
    %465 = vmatprep.subr.mxu0 0.0
    %466 = vmatpush1.msra.mxu0 0.0
    %467 = vmatprep.subr.mxu0 0.0
    %468 = vmatpush1.msra.mxu0 0.0
    %469 = vmatprep.subr.mxu0 0.0
    %470 = vmatpush1.msra.mxu0 0.0
    %471 = vmatprep.subr.mxu0 0.0
    %472 = vmatpush1.msra.mxu0 0.0
    %473 = vmatprep.subr.mxu0 0.0
    %474 = vmatpush1.msra.mxu0 0.0
    %475 = vmatprep.subr.mxu0 0.0
    %476 = vmatpush1.msra.mxu0 0.0
    %477 = vmatprep.mubr.f32.mxu0 0.0
    %478 = vmatmul.mubr.f32.gmra.mrb[0].mxu0 %v411
    %v479 = vpop.f32.mrb[0].mxu0
    %v480 = vadd.f32 0.0, %v479
    %v481 = vpop.f32.mrb[0].mxu0
    %482 = vdwg.mxu0
    %483 = vrot.lane.b32.xlu0 %v144, 120
    %v484 = vpop.permute.xlu0 %483
    %485 = vrot.lane.b32.xlu0 %v144, 88
    %v486 = vpop.permute.xlu0 %485
    %v487 = vsel %vm155, %v484, 0
    %v489 = vsel %vm155, %v486, 0
    %491 = vmatprep.subr.mxu0 0.0
    %492 = vmatpush1.xpose.msra.mxu0 %v489
    %493 = vmatprep.subr.mxu0 0.0
    %494 = vmatpush1.xpose.msra.mxu0 0.0
    %495 = vmatprep.subr.mxu0 0.0
    %496 = vmatpush1.xpose.msra.mxu0 0.0
    %497 = vmatprep.subr.mxu0 0.0
    %498 = vmatpush1.xpose.msra.mxu0 0.0
    %499 = vmatprep.subr.mxu0 0.0
    %500 = vmatpush1.xpose.msra.mxu0 0.0
    %501 = vmatprep.subr.mxu0 0.0
    %502 = vmatpush1.xpose.msra.mxu0 0.0
    %503 = vmatprep.subr.mxu0 0.0
    %504 = vmatpush1.xpose.msra.mxu0 0.0
    %505 = vmatprep.subr.mxu0 0.0
    %506 = vmatpush1.xpose.msra.mxu0 0.0
    %507 = vmatprep.subr.mxu0 0.0
    %508 = vmatpush1.xpose.msra.mxu0 0.0
    %509 = vmatprep.subr.mxu0 0.0
    %510 = vmatpush1.xpose.msra.mxu0 0.0
    %511 = vmatprep.subr.mxu0 0.0
    %512 = vmatpush1.xpose.msra.mxu0 0.0
    %513 = vmatprep.subr.mxu0 0.0
    %514 = vmatpush1.xpose.msra.mxu0 0.0
    %515 = vmatprep.subr.mxu0 0.0
    %516 = vmatpush1.xpose.msra.mxu0 0.0
    %517 = vmatprep.subr.mxu0 0.0
    %518 = vmatpush1.xpose.msra.mxu0 0.0
    %519 = vmatprep.subr.mxu0 0.0
    %520 = vmatpush1.xpose.msra.mxu0 0.0
    %521 = vmatprep.subr.mxu0 0.0
    %522 = vmatpush1.xpose.msra.mxu0 0.0
    %523 = vmatprep.subr.mxu0 0.0
    %524 = vmatpush1.xpose.msra.mxu0 0.0
    %525 = vmatprep.subr.mxu0 0.0
    %526 = vmatpush1.xpose.msra.mxu0 0.0
    %527 = vmatprep.subr.mxu0 0.0
    %528 = vmatpush1.xpose.msra.mxu0 0.0
    %529 = vmatprep.subr.mxu0 0.0
    %530 = vmatpush1.xpose.msra.mxu0 0.0
    %531 = vmatprep.subr.mxu0 0.0
    %532 = vmatpush1.xpose.msra.mxu0 0.0
    %533 = vmatprep.subr.mxu0 0.0
    %534 = vmatpush1.xpose.msra.mxu0 0.0
    %535 = vmatprep.subr.mxu0 0.0
    %536 = vmatpush1.xpose.msra.mxu0 0.0
    %537 = vmatprep.subr.mxu0 0.0
    %538 = vmatpush1.xpose.msra.mxu0 0.0
    %539 = vmatprep.subr.mxu0 0.0
    %540 = vmatpush1.xpose.msra.mxu0 0.0
    %541 = vmatprep.subr.mxu0 0.0
    %542 = vmatpush1.xpose.msra.mxu0 0.0
    %543 = vmatprep.subr.mxu0 0.0
    %544 = vmatpush1.xpose.msra.mxu0 0.0
    %545 = vmatprep.subr.mxu0 0.0
    %546 = vmatpush1.xpose.msra.mxu0 0.0
    %547 = vmatprep.subr.mxu0 0.0
    %548 = vmatpush1.xpose.msra.mxu0 0.0
    %549 = vmatprep.subr.mxu0 0.0
    %550 = vmatpush1.xpose.msra.mxu0 0.0
    %551 = vmatprep.subr.mxu0 0.0
    %552 = vmatpush1.xpose.msra.mxu0 0.0
    %553 = vmatprep.subr.mxu0 0.0
    %554 = vmatpush1.xpose.msra.mxu0 0.0
    %555 = vmatprep.mubr.f32.mxu0 0.0
    %556 = vmatmul.mubr.f32.gmra.mrb[0].mxu0 %v487
    %v557 = vpop.f32.mrb[0].mxu0
    %v558 = vadd.f32 0.0, %v557
    %v559 = vpop.f32.mrb[0].mxu0
    %560 = vdwg.mxu0
    %v561 = vmul.f32 %v558, 0.35355338
    %v562 = vsel %vm155, %v561, -inf
    %563 = vmax.xlane.f32.xlu0 %v562
    %v564 = vpop.xlane.xlu0 %563
    %v565 = vsub.f32 %v561, %v564
    %v566 = vmul.f32 %v565, 1.442695
    %v567 = vpow.pop %v566
    %v568 = vsel %vm155, %v567, 0.0
    %569 = vadd.xlane.f32.xlu0 %v568
    %v570 = vpop.xlane.xlu0 %569
    %v571 = vrcp.pop %v570
    %v572 = vmul.f32 %v567, %v571
    %573 = vrot.lane.b32.xlu0 %v144, 56
    %v574 = vpop.permute.xlu0 %573
    %v577 = vsel %vm155, %v572, 0
    %579 = vmatprep.subr.mxu0 0.0
    %580 = vmatpush1.msra.mxu0 %v574
    %581 = vmatprep.subr.mxu0 0.0
    %582 = vmatpush1.msra.mxu0 0.0
    %583 = vmatprep.subr.mxu0 0.0
    %584 = vmatpush1.msra.mxu0 0.0
    %585 = vmatprep.subr.mxu0 0.0
    %586 = vmatpush1.msra.mxu0 0.0
    %587 = vmatprep.subr.mxu0 0.0
    %588 = vmatpush1.msra.mxu0 0.0
    %589 = vmatprep.subr.mxu0 0.0
    %590 = vmatpush1.msra.mxu0 0.0
    %591 = vmatprep.subr.mxu0 0.0
    %592 = vmatpush1.msra.mxu0 0.0
    %593 = vmatprep.subr.mxu0 0.0
    %594 = vmatpush1.msra.mxu0 0.0
    %595 = vmatprep.subr.mxu0 0.0
    %596 = vmatpush1.msra.mxu0 0.0
    %597 = vmatprep.subr.mxu0 0.0
    %598 = vmatpush1.msra.mxu0 0.0
    %599 = vmatprep.subr.mxu0 0.0
    %600 = vmatpush1.msra.mxu0 0.0
    %601 = vmatprep.subr.mxu0 0.0
    %602 = vmatpush1.msra.mxu0 0.0
    %603 = vmatprep.subr.mxu0 0.0
    %604 = vmatpush1.msra.mxu0 0.0
    %605 = vmatprep.subr.mxu0 0.0
    %606 = vmatpush1.msra.mxu0 0.0
    %607 = vmatprep.subr.mxu0 0.0
    %608 = vmatpush1.msra.mxu0 0.0
    %609 = vmatprep.subr.mxu0 0.0
    %610 = vmatpush1.msra.mxu0 0.0
    %611 = vmatprep.subr.mxu0 0.0
    %612 = vmatpush1.msra.mxu0 0.0
    %613 = vmatprep.subr.mxu0 0.0
    %614 = vmatpush1.msra.mxu0 0.0
    %615 = vmatprep.subr.mxu0 0.0
    %616 = vmatpush1.msra.mxu0 0.0
    %617 = vmatprep.subr.mxu0 0.0
    %618 = vmatpush1.msra.mxu0 0.0
    %619 = vmatprep.subr.mxu0 0.0
    %620 = vmatpush1.msra.mxu0 0.0
    %621 = vmatprep.subr.mxu0 0.0
    %622 = vmatpush1.msra.mxu0 0.0
    %623 = vmatprep.subr.mxu0 0.0
    %624 = vmatpush1.msra.mxu0 0.0
    %625 = vmatprep.subr.mxu0 0.0
    %626 = vmatpush1.msra.mxu0 0.0
    %627 = vmatprep.subr.mxu0 0.0
    %628 = vmatpush1.msra.mxu0 0.0
    %629 = vmatprep.subr.mxu0 0.0
    %630 = vmatpush1.msra.mxu0 0.0
    %631 = vmatprep.subr.mxu0 0.0
    %632 = vmatpush1.msra.mxu0 0.0
    %633 = vmatprep.subr.mxu0 0.0
    %634 = vmatpush1.msra.mxu0 0.0
    %635 = vmatprep.subr.mxu0 0.0
    %636 = vmatpush1.msra.mxu0 0.0
    %637 = vmatprep.subr.mxu0 0.0
    %638 = vmatpush1.msra.mxu0 0.0
    %639 = vmatprep.subr.mxu0 0.0
    %640 = vmatpush1.msra.mxu0 0.0
    %641 = vmatprep.subr.mxu0 0.0
    %642 = vmatpush1.msra.mxu0 0.0
    %643 = vmatprep.mubr.f32.mxu0 0.0
    %644 = vmatmul.mubr.f32.gmra.mrb[0].mxu0 %v577
    %v645 = vpop.f32.mrb[0].mxu0
    %v646 = vadd.f32 0.0, %v645
    %v647 = vpop.f32.mrb[0].mxu0
    %648 = vdwg.mxu0
    %649 = vrot.lane.b32.xlu0 %v149, 120
    %v650 = vpop.permute.xlu0 %649
    %651 = vrot.lane.b32.xlu0 %v149, 88
    %v652 = vpop.permute.xlu0 %651
    %v653 = vsel %vm155, %v650, 0
    %v655 = vsel %vm155, %v652, 0
    %657 = vmatprep.subr.mxu0 0.0
    %658 = vmatpush1.xpose.msra.mxu0 %v655
    %659 = vmatprep.subr.mxu0 0.0
    %660 = vmatpush1.xpose.msra.mxu0 0.0
    %661 = vmatprep.subr.mxu0 0.0
    %662 = vmatpush1.xpose.msra.mxu0 0.0
    %663 = vmatprep.subr.mxu0 0.0
    %664 = vmatpush1.xpose.msra.mxu0 0.0
    %665 = vmatprep.subr.mxu0 0.0
    %666 = vmatpush1.xpose.msra.mxu0 0.0
    %667 = vmatprep.subr.mxu0 0.0
    %668 = vmatpush1.xpose.msra.mxu0 0.0
    %669 = vmatprep.subr.mxu0 0.0
    %670 = vmatpush1.xpose.msra.mxu0 0.0
    %671 = vmatprep.subr.mxu0 0.0
    %672 = vmatpush1.xpose.msra.mxu0 0.0
    %673 = vmatprep.subr.mxu0 0.0
    %674 = vmatpush1.xpose.msra.mxu0 0.0
    %675 = vmatprep.subr.mxu0 0.0
    %676 = vmatpush1.xpose.msra.mxu0 0.0
    %677 = vmatprep.subr.mxu0 0.0
    %678 = vmatpush1.xpose.msra.mxu0 0.0
    %679 = vmatprep.subr.mxu0 0.0
    %680 = vmatpush1.xpose.msra.mxu0 0.0
    %681 = vmatprep.subr.mxu0 0.0
    %682 = vmatpush1.xpose.msra.mxu0 0.0
    %683 = vmatprep.subr.mxu0 0.0
    %684 = vmatpush1.xpose.msra.mxu0 0.0
    %685 = vmatprep.subr.mxu0 0.0
    %686 = vmatpush1.xpose.msra.mxu0 0.0
    %687 = vmatprep.subr.mxu0 0.0
    %688 = vmatpush1.xpose.msra.mxu0 0.0
    %689 = vmatprep.subr.mxu0 0.0
    %690 = vmatpush1.xpose.msra.mxu0 0.0
    %691 = vmatprep.subr.mxu0 0.0
    %692 = vmatpush1.xpose.msra.mxu0 0.0
    %693 = vmatprep.subr.mxu0 0.0
    %694 = vmatpush1.xpose.msra.mxu0 0.0
    %695 = vmatprep.subr.mxu0 0.0
    %696 = vmatpush1.xpose.msra.mxu0 0.0
    %697 = vmatprep.subr.mxu0 0.0
    %698 = vmatpush1.xpose.msra.mxu0 0.0
    %699 = vmatprep.subr.mxu0 0.0
    %700 = vmatpush1.xpose.msra.mxu0 0.0
    %701 = vmatprep.subr.mxu0 0.0
    %702 = vmatpush1.xpose.msra.mxu0 0.0
    %703 = vmatprep.subr.mxu0 0.0
    %704 = vmatpush1.xpose.msra.mxu0 0.0
    %705 = vmatprep.subr.mxu0 0.0
    %706 = vmatpush1.xpose.msra.mxu0 0.0
    %707 = vmatprep.subr.mxu0 0.0
    %708 = vmatpush1.xpose.msra.mxu0 0.0
    %709 = vmatprep.subr.mxu0 0.0
    %710 = vmatpush1.xpose.msra.mxu0 0.0
    %711 = vmatprep.subr.mxu0 0.0
    %712 = vmatpush1.xpose.msra.mxu0 0.0
    %713 = vmatprep.subr.mxu0 0.0
    %714 = vmatpush1.xpose.msra.mxu0 0.0
    %715 = vmatprep.subr.mxu0 0.0
    %716 = vmatpush1.xpose.msra.mxu0 0.0
    %717 = vmatprep.subr.mxu0 0.0
    %718 = vmatpush1.xpose.msra.mxu0 0.0
    %719 = vmatprep.subr.mxu0 0.0
    %720 = vmatpush1.xpose.msra.mxu0 0.0
    %721 = vmatprep.mubr.f32.mxu0 0.0
    %722 = vmatmul.mubr.f32.gmra.mrb[0].mxu0 %v653
    %v723 = vpop.f32.mrb[0].mxu0
    %v724 = vadd.f32 0.0, %v723
    %v725 = vpop.f32.mrb[0].mxu0
    %726 = vdwg.mxu0
    %v727 = vmul.f32 %v724, 0.35355338
    %v728 = vsel %vm155, %v727, -inf
    %729 = vmax.xlane.f32.xlu0 %v728
    %v730 = vpop.xlane.xlu0 %729
    %v731 = vsub.f32 %v727, %v730
    %v732 = vmul.f32 %v731, 1.442695
    %v733 = vpow.pop %v732
    %v734 = vsel %vm155, %v733, 0.0
    %735 = vadd.xlane.f32.xlu0 %v734
    %v736 = vpop.xlane.xlu0 %735
    %v737 = vrcp.pop %v736
    %v738 = vmul.f32 %v733, %v737
    %739 = vrot.lane.b32.xlu0 %v149, 56
    %v740 = vpop.permute.xlu0 %739
    %v743 = vsel %vm155, %v738, 0
    %745 = vmatprep.subr.mxu0 0.0
    %746 = vmatpush1.msra.mxu0 %v740
    %747 = vmatprep.subr.mxu0 0.0
    %748 = vmatpush1.msra.mxu0 0.0
    %749 = vmatprep.subr.mxu0 0.0
    %750 = vmatpush1.msra.mxu0 0.0
    %751 = vmatprep.subr.mxu0 0.0
    %752 = vmatpush1.msra.mxu0 0.0
    %753 = vmatprep.subr.mxu0 0.0
    %754 = vmatpush1.msra.mxu0 0.0
    %755 = vmatprep.subr.mxu0 0.0
    %756 = vmatpush1.msra.mxu0 0.0
    %757 = vmatprep.subr.mxu0 0.0
    %758 = vmatpush1.msra.mxu0 0.0
    %759 = vmatprep.subr.mxu0 0.0
    %760 = vmatpush1.msra.mxu0 0.0
    %761 = vmatprep.subr.mxu0 0.0
    %762 = vmatpush1.msra.mxu0 0.0
    %763 = vmatprep.subr.mxu0 0.0
    %764 = vmatpush1.msra.mxu0 0.0
    %765 = vmatprep.subr.mxu0 0.0
    %766 = vmatpush1.msra.mxu0 0.0
    %767 = vmatprep.subr.mxu0 0.0
    %768 = vmatpush1.msra.mxu0 0.0
    %769 = vmatprep.subr.mxu0 0.0
    %770 = vmatpush1.msra.mxu0 0.0
    %771 = vmatprep.subr.mxu0 0.0
    %772 = vmatpush1.msra.mxu0 0.0
    %773 = vmatprep.subr.mxu0 0.0
    %774 = vmatpush1.msra.mxu0 0.0
    %775 = vmatprep.subr.mxu0 0.0
    %776 = vmatpush1.msra.mxu0 0.0
    %777 = vmatprep.subr.mxu0 0.0
    %778 = vmatpush1.msra.mxu0 0.0
    %779 = vmatprep.subr.mxu0 0.0
    %780 = vmatpush1.msra.mxu0 0.0
    %781 = vmatprep.subr.mxu0 0.0
    %782 = vmatpush1.msra.mxu0 0.0
    %783 = vmatprep.subr.mxu0 0.0
    %784 = vmatpush1.msra.mxu0 0.0
    %785 = vmatprep.subr.mxu0 0.0
    %786 = vmatpush1.msra.mxu0 0.0
    %787 = vmatprep.subr.mxu0 0.0
    %788 = vmatpush1.msra.mxu0 0.0
    %789 = vmatprep.subr.mxu0 0.0
    %790 = vmatpush1.msra.mxu0 0.0
    %791 = vmatprep.subr.mxu0 0.0
    %792 = vmatpush1.msra.mxu0 0.0
    %793 = vmatprep.subr.mxu0 0.0
    %794 = vmatpush1.msra.mxu0 0.0
    %795 = vmatprep.subr.mxu0 0.0
    %796 = vmatpush1.msra.mxu0 0.0
    %797 = vmatprep.subr.mxu0 0.0
    %798 = vmatpush1.msra.mxu0 0.0
    %799 = vmatprep.subr.mxu0 0.0
    %800 = vmatpush1.msra.mxu0 0.0
    %801 = vmatprep.subr.mxu0 0.0
    %802 = vmatpush1.msra.mxu0 0.0
    %803 = vmatprep.subr.mxu0 0.0
    %804 = vmatpush1.msra.mxu0 0.0
    %805 = vmatprep.subr.mxu0 0.0
    %806 = vmatpush1.msra.mxu0 0.0
    %807 = vmatprep.subr.mxu0 0.0
    %808 = vmatpush1.msra.mxu0 0.0
    %809 = vmatprep.mubr.f32.mxu0 0.0
    %810 = vmatmul.mubr.f32.gmra.mrb[0].mxu0 %v743
    %v811 = vpop.f32.mrb[0].mxu0
    %v812 = vadd.f32 0.0, %v811
    %v813 = vpop.f32.mrb[0].mxu0
    %814 = vdwg.mxu0
    %815 = vrot.lane.b32.xlu0 %v144, 112
    %v816 = vpop.permute.xlu0 %815
    %817 = vrot.lane.b32.xlu0 %v144, 80
    %v818 = vpop.permute.xlu0 %817
    %v819 = vsel %vm155, %v816, 0
    %v821 = vsel %vm155, %v818, 0
    %823 = vmatprep.subr.mxu0 0.0
    %824 = vmatpush1.xpose.msra.mxu0 %v821
    %825 = vmatprep.subr.mxu0 0.0
    %826 = vmatpush1.xpose.msra.mxu0 0.0
    %827 = vmatprep.subr.mxu0 0.0
    %828 = vmatpush1.xpose.msra.mxu0 0.0
    %829 = vmatprep.subr.mxu0 0.0
    %830 = vmatpush1.xpose.msra.mxu0 0.0
    %831 = vmatprep.subr.mxu0 0.0
    %832 = vmatpush1.xpose.msra.mxu0 0.0
    %833 = vmatprep.subr.mxu0 0.0
    %834 = vmatpush1.xpose.msra.mxu0 0.0
    %835 = vmatprep.subr.mxu0 0.0
    %836 = vmatpush1.xpose.msra.mxu0 0.0
    %837 = vmatprep.subr.mxu0 0.0
    %838 = vmatpush1.xpose.msra.mxu0 0.0
    %839 = vmatprep.subr.mxu0 0.0
    %840 = vmatpush1.xpose.msra.mxu0 0.0
    %841 = vmatprep.subr.mxu0 0.0
    %842 = vmatpush1.xpose.msra.mxu0 0.0
    %843 = vmatprep.subr.mxu0 0.0
    %844 = vmatpush1.xpose.msra.mxu0 0.0
    %845 = vmatprep.subr.mxu0 0.0
    %846 = vmatpush1.xpose.msra.mxu0 0.0
    %847 = vmatprep.subr.mxu0 0.0
    %848 = vmatpush1.xpose.msra.mxu0 0.0
    %849 = vmatprep.subr.mxu0 0.0
    %850 = vmatpush1.xpose.msra.mxu0 0.0
    %851 = vmatprep.subr.mxu0 0.0
    %852 = vmatpush1.xpose.msra.mxu0 0.0
    %853 = vmatprep.subr.mxu0 0.0
    %854 = vmatpush1.xpose.msra.mxu0 0.0
    %855 = vmatprep.subr.mxu0 0.0
    %856 = vmatpush1.xpose.msra.mxu0 0.0
    %857 = vmatprep.subr.mxu0 0.0
    %858 = vmatpush1.xpose.msra.mxu0 0.0
    %859 = vmatprep.subr.mxu0 0.0
    %860 = vmatpush1.xpose.msra.mxu0 0.0
    %861 = vmatprep.subr.mxu0 0.0
    %862 = vmatpush1.xpose.msra.mxu0 0.0
    %863 = vmatprep.subr.mxu0 0.0
    %864 = vmatpush1.xpose.msra.mxu0 0.0
    %865 = vmatprep.subr.mxu0 0.0
    %866 = vmatpush1.xpose.msra.mxu0 0.0
    %867 = vmatprep.subr.mxu0 0.0
    %868 = vmatpush1.xpose.msra.mxu0 0.0
    %869 = vmatprep.subr.mxu0 0.0
    %870 = vmatpush1.xpose.msra.mxu0 0.0
    %871 = vmatprep.subr.mxu0 0.0
    %872 = vmatpush1.xpose.msra.mxu0 0.0
    %873 = vmatprep.subr.mxu0 0.0
    %874 = vmatpush1.xpose.msra.mxu0 0.0
    %875 = vmatprep.subr.mxu0 0.0
    %876 = vmatpush1.xpose.msra.mxu0 0.0
    %877 = vmatprep.subr.mxu0 0.0
    %878 = vmatpush1.xpose.msra.mxu0 0.0
    %879 = vmatprep.subr.mxu0 0.0
    %880 = vmatpush1.xpose.msra.mxu0 0.0
    %881 = vmatprep.subr.mxu0 0.0
    %882 = vmatpush1.xpose.msra.mxu0 0.0
    %883 = vmatprep.subr.mxu0 0.0
    %884 = vmatpush1.xpose.msra.mxu0 0.0
    %885 = vmatprep.subr.mxu0 0.0
    %886 = vmatpush1.xpose.msra.mxu0 0.0
    %887 = vmatprep.mubr.f32.mxu0 0.0
    %888 = vmatmul.mubr.f32.gmra.mrb[0].mxu0 %v819
    %v889 = vpop.f32.mrb[0].mxu0
    %v890 = vadd.f32 0.0, %v889
    %v891 = vpop.f32.mrb[0].mxu0
    %892 = vdwg.mxu0
    %v893 = vmul.f32 %v890, 0.35355338
    %v894 = vsel %vm155, %v893, -inf
    %895 = vmax.xlane.f32.xlu0 %v894
    %v896 = vpop.xlane.xlu0 %895
    %v897 = vsub.f32 %v893, %v896
    %v898 = vmul.f32 %v897, 1.442695
    %v899 = vpow.pop %v898
    %v900 = vsel %vm155, %v899, 0.0
    %901 = vadd.xlane.f32.xlu0 %v900
    %v902 = vpop.xlane.xlu0 %901
    %v903 = vrcp.pop %v902
    %v904 = vmul.f32 %v899, %v903
    %905 = vrot.lane.b32.xlu0 %v144, 48
    %v906 = vpop.permute.xlu0 %905
    %v909 = vsel %vm155, %v904, 0
    %911 = vmatprep.subr.mxu0 0.0
    %912 = vmatpush1.msra.mxu0 %v906
    %913 = vmatprep.subr.mxu0 0.0
    %914 = vmatpush1.msra.mxu0 0.0
    %915 = vmatprep.subr.mxu0 0.0
    %916 = vmatpush1.msra.mxu0 0.0
    %917 = vmatprep.subr.mxu0 0.0
    %918 = vmatpush1.msra.mxu0 0.0
    %919 = vmatprep.subr.mxu0 0.0
    %920 = vmatpush1.msra.mxu0 0.0
    %921 = vmatprep.subr.mxu0 0.0
    %922 = vmatpush1.msra.mxu0 0.0
    %923 = vmatprep.subr.mxu0 0.0
    %924 = vmatpush1.msra.mxu0 0.0
    %925 = vmatprep.subr.mxu0 0.0
    %926 = vmatpush1.msra.mxu0 0.0
    %927 = vmatprep.subr.mxu0 0.0
    %928 = vmatpush1.msra.mxu0 0.0
    %929 = vmatprep.subr.mxu0 0.0
    %930 = vmatpush1.msra.mxu0 0.0
    %931 = vmatprep.subr.mxu0 0.0
    %932 = vmatpush1.msra.mxu0 0.0
    %933 = vmatprep.subr.mxu0 0.0
    %934 = vmatpush1.msra.mxu0 0.0
    %935 = vmatprep.subr.mxu0 0.0
    %936 = vmatpush1.msra.mxu0 0.0
    %937 = vmatprep.subr.mxu0 0.0
    %938 = vmatpush1.msra.mxu0 0.0
    %939 = vmatprep.subr.mxu0 0.0
    %940 = vmatpush1.msra.mxu0 0.0
    %941 = vmatprep.subr.mxu0 0.0
    %942 = vmatpush1.msra.mxu0 0.0
    %943 = vmatprep.subr.mxu0 0.0
    %944 = vmatpush1.msra.mxu0 0.0
    %945 = vmatprep.subr.mxu0 0.0
    %946 = vmatpush1.msra.mxu0 0.0
    %947 = vmatprep.subr.mxu0 0.0
    %948 = vmatpush1.msra.mxu0 0.0
    %949 = vmatprep.subr.mxu0 0.0
    %950 = vmatpush1.msra.mxu0 0.0
    %951 = vmatprep.subr.mxu0 0.0
    %952 = vmatpush1.msra.mxu0 0.0
    %953 = vmatprep.subr.mxu0 0.0
    %954 = vmatpush1.msra.mxu0 0.0
    %955 = vmatprep.subr.mxu0 0.0
    %956 = vmatpush1.msra.mxu0 0.0
    %957 = vmatprep.subr.mxu0 0.0
    %958 = vmatpush1.msra.mxu0 0.0
    %959 = vmatprep.subr.mxu0 0.0
    %960 = vmatpush1.msra.mxu0 0.0
    %961 = vmatprep.subr.mxu0 0.0
    %962 = vmatpush1.msra.mxu0 0.0
    %963 = vmatprep.subr.mxu0 0.0
    %964 = vmatpush1.msra.mxu0 0.0
    %965 = vmatprep.subr.mxu0 0.0
    %966 = vmatpush1.msra.mxu0 0.0
    %967 = vmatprep.subr.mxu0 0.0
    %968 = vmatpush1.msra.mxu0 0.0
    %969 = vmatprep.subr.mxu0 0.0
    %970 = vmatpush1.msra.mxu0 0.0
    %971 = vmatprep.subr.mxu0 0.0
    %972 = vmatpush1.msra.mxu0 0.0
    %973 = vmatprep.subr.mxu0 0.0
    %974 = vmatpush1.msra.mxu0 0.0
    %975 = vmatprep.mubr.f32.mxu0 0.0
    %976 = vmatmul.mubr.f32.gmra.mrb[0].mxu0 %v909
    %v977 = vpop.f32.mrb[0].mxu0
    %v978 = vadd.f32 0.0, %v977
    %v979 = vpop.f32.mrb[0].mxu0
    %980 = vdwg.mxu0
    %981 = vrot.lane.b32.xlu0 %v149, 112
    %v982 = vpop.permute.xlu0 %981
    %983 = vrot.lane.b32.xlu0 %v149, 80
    %v984 = vpop.permute.xlu0 %983
    %v985 = vsel %vm155, %v982, 0
    %v987 = vsel %vm155, %v984, 0
    %989 = vmatprep.subr.mxu0 0.0
    %990 = vmatpush1.xpose.msra.mxu0 %v987
    %991 = vmatprep.subr.mxu0 0.0
    %992 = vmatpush1.xpose.msra.mxu0 0.0
    %993 = vmatprep.subr.mxu0 0.0
    %994 = vmatpush1.xpose.msra.mxu0 0.0
    %995 = vmatprep.subr.mxu0 0.0
    %996 = vmatpush1.xpose.msra.mxu0 0.0
    %997 = vmatprep.subr.mxu0 0.0
    %998 = vmatpush1.xpose.msra.mxu0 0.0
    %999 = vmatprep.subr.mxu0 0.0
    %1000 = vmatpush1.xpose.msra.mxu0 0.0
    %1001 = vmatprep.subr.mxu0 0.0
    %1002 = vmatpush1.xpose.msra.mxu0 0.0
    %1003 = vmatprep.subr.mxu0 0.0
    %1004 = vmatpush1.xpose.msra.mxu0 0.0
    %1005 = vmatprep.subr.mxu0 0.0
    %1006 = vmatpush1.xpose.msra.mxu0 0.0
    %1007 = vmatprep.subr.mxu0 0.0
    %1008 = vmatpush1.xpose.msra.mxu0 0.0
    %1009 = vmatprep.subr.mxu0 0.0
    %1010 = vmatpush1.xpose.msra.mxu0 0.0
    %1011 = vmatprep.subr.mxu0 0.0
    %1012 = vmatpush1.xpose.msra.mxu0 0.0
    %1013 = vmatprep.subr.mxu0 0.0
    %1014 = vmatpush1.xpose.msra.mxu0 0.0
    %1015 = vmatprep.subr.mxu0 0.0
    %1016 = vmatpush1.xpose.msra.mxu0 0.0
    %1017 = vmatprep.subr.mxu0 0.0
    %1018 = vmatpush1.xpose.msra.mxu0 0.0
    %1019 = vmatprep.subr.mxu0 0.0
    %1020 = vmatpush1.xpose.msra.mxu0 0.0
    %1021 = vmatprep.subr.mxu0 0.0
    %1022 = vmatpush1.xpose.msra.mxu0 0.0
    %1023 = vmatprep.subr.mxu0 0.0
    %1024 = vmatpush1.xpose.msra.mxu0 0.0
    %1025 = vmatprep.subr.mxu0 0.0
    %1026 = vmatpush1.xpose.msra.mxu0 0.0
    %1027 = vmatprep.subr.mxu0 0.0
    %1028 = vmatpush1.xpose.msra.mxu0 0.0
    %1029 = vmatprep.subr.mxu0 0.0
    %1030 = vmatpush1.xpose.msra.mxu0 0.0
    %1031 = vmatprep.subr.mxu0 0.0
    %1032 = vmatpush1.xpose.msra.mxu0 0.0
    %1033 = vmatprep.subr.mxu0 0.0
    %1034 = vmatpush1.xpose.msra.mxu0 0.0
    %1035 = vmatprep.subr.mxu0 0.0
    %1036 = vmatpush1.xpose.msra.mxu0 0.0
    %1037 = vmatprep.subr.mxu0 0.0
    %1038 = vmatpush1.xpose.msra.mxu0 0.0
    %1039 = vmatprep.subr.mxu0 0.0
    %1040 = vmatpush1.xpose.msra.mxu0 0.0
    %1041 = vmatprep.subr.mxu0 0.0
    %1042 = vmatpush1.xpose.msra.mxu0 0.0
    %1043 = vmatprep.subr.mxu0 0.0
    %1044 = vmatpush1.xpose.msra.mxu0 0.0
    %1045 = vmatprep.subr.mxu0 0.0
    %1046 = vmatpush1.xpose.msra.mxu0 0.0
    %1047 = vmatprep.subr.mxu0 0.0
    %1048 = vmatpush1.xpose.msra.mxu0 0.0
    %1049 = vmatprep.subr.mxu0 0.0
    %1050 = vmatpush1.xpose.msra.mxu0 0.0
    %1051 = vmatprep.subr.mxu0 0.0
    %1052 = vmatpush1.xpose.msra.mxu0 0.0
    %1053 = vmatprep.mubr.f32.mxu0 0.0
    %1054 = vmatmul.mubr.f32.gmra.mrb[0].mxu0 %v985
    %v1055 = vpop.f32.mrb[0].mxu0
    %v1056 = vadd.f32 0.0, %v1055
    %v1057 = vpop.f32.mrb[0].mxu0
    %1058 = vdwg.mxu0
    %v1059 = vmul.f32 %v1056, 0.35355338
    %v1060 = vsel %vm155, %v1059, -inf
    %1061 = vmax.xlane.f32.xlu0 %v1060
    %v1062 = vpop.xlane.xlu0 %1061
    %v1063 = vsub.f32 %v1059, %v1062
    %v1064 = vmul.f32 %v1063, 1.442695
    %v1065 = vpow.pop %v1064
    %v1066 = vsel %vm155, %v1065, 0.0
    %1067 = vadd.xlane.f32.xlu0 %v1066
    %v1068 = vpop.xlane.xlu0 %1067
    %v1069 = vrcp.pop %v1068
    %v1070 = vmul.f32 %v1065, %v1069
    %1071 = vrot.lane.b32.xlu0 %v149, 48
    %v1072 = vpop.permute.xlu0 %1071
    %v1075 = vsel %vm155, %v1070, 0
    %1077 = vmatprep.subr.mxu0 0.0
    %1078 = vmatpush1.msra.mxu0 %v1072
    %1079 = vmatprep.subr.mxu0 0.0
    %1080 = vmatpush1.msra.mxu0 0.0
    %1081 = vmatprep.subr.mxu0 0.0
    %1082 = vmatpush1.msra.mxu0 0.0
    %1083 = vmatprep.subr.mxu0 0.0
    %1084 = vmatpush1.msra.mxu0 0.0
    %1085 = vmatprep.subr.mxu0 0.0
    %1086 = vmatpush1.msra.mxu0 0.0
    %1087 = vmatprep.subr.mxu0 0.0
    %1088 = vmatpush1.msra.mxu0 0.0
    %1089 = vmatprep.subr.mxu0 0.0
    %1090 = vmatpush1.msra.mxu0 0.0
    %1091 = vmatprep.subr.mxu0 0.0
    %1092 = vmatpush1.msra.mxu0 0.0
    %1093 = vmatprep.subr.mxu0 0.0
    %1094 = vmatpush1.msra.mxu0 0.0
    %1095 = vmatprep.subr.mxu0 0.0
    %1096 = vmatpush1.msra.mxu0 0.0
    %1097 = vmatprep.subr.mxu0 0.0
    %1098 = vmatpush1.msra.mxu0 0.0
    %1099 = vmatprep.subr.mxu0 0.0
    %1100 = vmatpush1.msra.mxu0 0.0
    %1101 = vmatprep.subr.mxu0 0.0
    %1102 = vmatpush1.msra.mxu0 0.0
    %1103 = vmatprep.subr.mxu0 0.0
    %1104 = vmatpush1.msra.mxu0 0.0
    %1105 = vmatprep.subr.mxu0 0.0
    %1106 = vmatpush1.msra.mxu0 0.0
    %1107 = vmatprep.subr.mxu0 0.0
    %1108 = vmatpush1.msra.mxu0 0.0
    %1109 = vmatprep.subr.mxu0 0.0
    %1110 = vmatpush1.msra.mxu0 0.0
    %1111 = vmatprep.subr.mxu0 0.0
    %1112 = vmatpush1.msra.mxu0 0.0
    %1113 = vmatprep.subr.mxu0 0.0
    %1114 = vmatpush1.msra.mxu0 0.0
    %1115 = vmatprep.subr.mxu0 0.0
    %1116 = vmatpush1.msra.mxu0 0.0
    %1117 = vmatprep.subr.mxu0 0.0
    %1118 = vmatpush1.msra.mxu0 0.0
    %1119 = vmatprep.subr.mxu0 0.0
    %1120 = vmatpush1.msra.mxu0 0.0
    %1121 = vmatprep.subr.mxu0 0.0
    %1122 = vmatpush1.msra.mxu0 0.0
    %1123 = vmatprep.subr.mxu0 0.0
    %1124 = vmatpush1.msra.mxu0 0.0
    %1125 = vmatprep.subr.mxu0 0.0
    %1126 = vmatpush1.msra.mxu0 0.0
    %1127 = vmatprep.subr.mxu0 0.0
    %1128 = vmatpush1.msra.mxu0 0.0
    %1129 = vmatprep.subr.mxu0 0.0
    %1130 = vmatpush1.msra.mxu0 0.0
    %1131 = vmatprep.subr.mxu0 0.0
    %1132 = vmatpush1.msra.mxu0 0.0
    %1133 = vmatprep.subr.mxu0 0.0
    %1134 = vmatpush1.msra.mxu0 0.0
    %1135 = vmatprep.subr.mxu0 0.0
    %1136 = vmatpush1.msra.mxu0 0.0
    %1137 = vmatprep.subr.mxu0 0.0
    %1138 = vmatpush1.msra.mxu0 0.0
    %1139 = vmatprep.subr.mxu0 0.0
    %1140 = vmatpush1.msra.mxu0 0.0
    %1141 = vmatprep.mubr.f32.mxu0 0.0
    %1142 = vmatmul.mubr.f32.gmra.mrb[0].mxu0 %v1075
    %v1143 = vpop.f32.mrb[0].mxu0
    %v1144 = vadd.f32 0.0, %v1143
    %v1145 = vpop.f32.mrb[0].mxu0
    %1146 = vdwg.mxu0
    %1147 = vrot.lane.b32.xlu0 %v144, 104
    %v1148 = vpop.permute.xlu0 %1147
    %1149 = vrot.lane.b32.xlu0 %v144, 72
    %v1150 = vpop.permute.xlu0 %1149
    %v1151 = vsel %vm155, %v1148, 0
    %v1153 = vsel %vm155, %v1150, 0
    %1155 = vmatprep.subr.mxu0 0.0
    %1156 = vmatpush1.xpose.msra.mxu0 %v1153
    %1157 = vmatprep.subr.mxu0 0.0
    %1158 = vmatpush1.xpose.msra.mxu0 0.0
    %1159 = vmatprep.subr.mxu0 0.0
    %1160 = vmatpush1.xpose.msra.mxu0 0.0
    %1161 = vmatprep.subr.mxu0 0.0
    %1162 = vmatpush1.xpose.msra.mxu0 0.0
    %1163 = vmatprep.subr.mxu0 0.0
    %1164 = vmatpush1.xpose.msra.mxu0 0.0
    %1165 = vmatprep.subr.mxu0 0.0
    %1166 = vmatpush1.xpose.msra.mxu0 0.0
    %1167 = vmatprep.subr.mxu0 0.0
    %1168 = vmatpush1.xpose.msra.mxu0 0.0
    %1169 = vmatprep.subr.mxu0 0.0
    %1170 = vmatpush1.xpose.msra.mxu0 0.0
    %1171 = vmatprep.subr.mxu0 0.0
    %1172 = vmatpush1.xpose.msra.mxu0 0.0
    %1173 = vmatprep.subr.mxu0 0.0
    %1174 = vmatpush1.xpose.msra.mxu0 0.0
    %1175 = vmatprep.subr.mxu0 0.0
    %1176 = vmatpush1.xpose.msra.mxu0 0.0
    %1177 = vmatprep.subr.mxu0 0.0
    %1178 = vmatpush1.xpose.msra.mxu0 0.0
    %1179 = vmatprep.subr.mxu0 0.0
    %1180 = vmatpush1.xpose.msra.mxu0 0.0
    %1181 = vmatprep.subr.mxu0 0.0
    %1182 = vmatpush1.xpose.msra.mxu0 0.0
    %1183 = vmatprep.subr.mxu0 0.0
    %1184 = vmatpush1.xpose.msra.mxu0 0.0
    %1185 = vmatprep.subr.mxu0 0.0
    %1186 = vmatpush1.xpose.msra.mxu0 0.0
    %1187 = vmatprep.subr.mxu0 0.0
    %1188 = vmatpush1.xpose.msra.mxu0 0.0
    %1189 = vmatprep.subr.mxu0 0.0
    %1190 = vmatpush1.xpose.msra.mxu0 0.0
    %1191 = vmatprep.subr.mxu0 0.0
    %1192 = vmatpush1.xpose.msra.mxu0 0.0
    %1193 = vmatprep.subr.mxu0 0.0
    %1194 = vmatpush1.xpose.msra.mxu0 0.0
    %1195 = vmatprep.subr.mxu0 0.0
    %1196 = vmatpush1.xpose.msra.mxu0 0.0
    %1197 = vmatprep.subr.mxu0 0.0
    %1198 = vmatpush1.xpose.msra.mxu0 0.0
    %1199 = vmatprep.subr.mxu0 0.0
    %1200 = vmatpush1.xpose.msra.mxu0 0.0
    %1201 = vmatprep.subr.mxu0 0.0
    %1202 = vmatpush1.xpose.msra.mxu0 0.0
    %1203 = vmatprep.subr.mxu0 0.0
    %1204 = vmatpush1.xpose.msra.mxu0 0.0
    %1205 = vmatprep.subr.mxu0 0.0
    %1206 = vmatpush1.xpose.msra.mxu0 0.0
    %1207 = vmatprep.subr.mxu0 0.0
    %1208 = vmatpush1.xpose.msra.mxu0 0.0
    %1209 = vmatprep.subr.mxu0 0.0
    %1210 = vmatpush1.xpose.msra.mxu0 0.0
    %1211 = vmatprep.subr.mxu0 0.0
    %1212 = vmatpush1.xpose.msra.mxu0 0.0
    %1213 = vmatprep.subr.mxu0 0.0
    %1214 = vmatpush1.xpose.msra.mxu0 0.0
    %1215 = vmatprep.subr.mxu0 0.0
    %1216 = vmatpush1.xpose.msra.mxu0 0.0
    %1217 = vmatprep.subr.mxu0 0.0
    %1218 = vmatpush1.xpose.msra.mxu0 0.0
    %1219 = vmatprep.mubr.f32.mxu0 0.0
    %1220 = vmatmul.mubr.f32.gmra.mrb[0].mxu0 %v1151
    %v1221 = vpop.f32.mrb[0].mxu0
    %v1222 = vadd.f32 0.0, %v1221
    %v1223 = vpop.f32.mrb[0].mxu0
    %1224 = vdwg.mxu0
    %v1225 = vmul.f32 %v1222, 0.35355338
    %v1226 = vsel %vm155, %v1225, -inf
    %1227 = vmax.xlane.f32.xlu0 %v1226
    %v1228 = vpop.xlane.xlu0 %1227
    %v1229 = vsub.f32 %v1225, %v1228
    %v1230 = vmul.f32 %v1229, 1.442695
    %v1231 = vpow.pop %v1230
    %v1232 = vsel %vm155, %v1231, 0.0
    %1233 = vadd.xlane.f32.xlu0 %v1232
    %v1234 = vpop.xlane.xlu0 %1233
    %v1235 = vrcp.pop %v1234
    %v1236 = vmul.f32 %v1231, %v1235
    %1237 = vrot.lane.b32.xlu0 %v144, 40
    %v1238 = vpop.permute.xlu0 %1237
    %v1241 = vsel %vm155, %v1236, 0
    %1243 = vmatprep.subr.mxu0 0.0
    %1244 = vmatpush1.msra.mxu0 %v1238
    %1245 = vmatprep.subr.mxu0 0.0
    %1246 = vmatpush1.msra.mxu0 0.0
    %1247 = vmatprep.subr.mxu0 0.0
    %1248 = vmatpush1.msra.mxu0 0.0
    %1249 = vmatprep.subr.mxu0 0.0
    %1250 = vmatpush1.msra.mxu0 0.0
    %1251 = vmatprep.subr.mxu0 0.0
    %1252 = vmatpush1.msra.mxu0 0.0
    %1253 = vmatprep.subr.mxu0 0.0
    %1254 = vmatpush1.msra.mxu0 0.0
    %1255 = vmatprep.subr.mxu0 0.0
    %1256 = vmatpush1.msra.mxu0 0.0
    %1257 = vmatprep.subr.mxu0 0.0
    %1258 = vmatpush1.msra.mxu0 0.0
    %1259 = vmatprep.subr.mxu0 0.0
    %1260 = vmatpush1.msra.mxu0 0.0
    %1261 = vmatprep.subr.mxu0 0.0
    %1262 = vmatpush1.msra.mxu0 0.0
    %1263 = vmatprep.subr.mxu0 0.0
    %1264 = vmatpush1.msra.mxu0 0.0
    %1265 = vmatprep.subr.mxu0 0.0
    %1266 = vmatpush1.msra.mxu0 0.0
    %1267 = vmatprep.subr.mxu0 0.0
    %1268 = vmatpush1.msra.mxu0 0.0
    %1269 = vmatprep.subr.mxu0 0.0
    %1270 = vmatpush1.msra.mxu0 0.0
    %1271 = vmatprep.subr.mxu0 0.0
    %1272 = vmatpush1.msra.mxu0 0.0
    %1273 = vmatprep.subr.mxu0 0.0
    %1274 = vmatpush1.msra.mxu0 0.0
    %1275 = vmatprep.subr.mxu0 0.0
    %1276 = vmatpush1.msra.mxu0 0.0
    %1277 = vmatprep.subr.mxu0 0.0
    %1278 = vmatpush1.msra.mxu0 0.0
    %1279 = vmatprep.subr.mxu0 0.0
    %1280 = vmatpush1.msra.mxu0 0.0
    %1281 = vmatprep.subr.mxu0 0.0
    %1282 = vmatpush1.msra.mxu0 0.0
    %1283 = vmatprep.subr.mxu0 0.0
    %1284 = vmatpush1.msra.mxu0 0.0
    %1285 = vmatprep.subr.mxu0 0.0
    %1286 = vmatpush1.msra.mxu0 0.0
    %1287 = vmatprep.subr.mxu0 0.0
    %1288 = vmatpush1.msra.mxu0 0.0
    %1289 = vmatprep.subr.mxu0 0.0
    %1290 = vmatpush1.msra.mxu0 0.0
    %1291 = vmatprep.subr.mxu0 0.0
    %1292 = vmatpush1.msra.mxu0 0.0
    %1293 = vmatprep.subr.mxu0 0.0
    %1294 = vmatpush1.msra.mxu0 0.0
    %1295 = vmatprep.subr.mxu0 0.0
    %1296 = vmatpush1.msra.mxu0 0.0
    %1297 = vmatprep.subr.mxu0 0.0
    %1298 = vmatpush1.msra.mxu0 0.0
    %1299 = vmatprep.subr.mxu0 0.0
    %1300 = vmatpush1.msra.mxu0 0.0
    %1301 = vmatprep.subr.mxu0 0.0
    %1302 = vmatpush1.msra.mxu0 0.0
    %1303 = vmatprep.subr.mxu0 0.0
    %1304 = vmatpush1.msra.mxu0 0.0
    %1305 = vmatprep.subr.mxu0 0.0
    %1306 = vmatpush1.msra.mxu0 0.0
    %1307 = vmatprep.mubr.f32.mxu0 0.0
    %1308 = vmatmul.mubr.f32.gmra.mrb[0].mxu0 %v1241
    %v1309 = vpop.f32.mrb[0].mxu0
    %v1310 = vadd.f32 0.0, %v1309
    %v1311 = vpop.f32.mrb[0].mxu0
    %1312 = vdwg.mxu0
    %1313 = vrot.lane.b32.xlu0 %v149, 104
    %v1314 = vpop.permute.xlu0 %1313
    %1315 = vrot.lane.b32.xlu0 %v149, 72
    %v1316 = vpop.permute.xlu0 %1315
    %v1317 = vsel %vm155, %v1314, 0
    %v1319 = vsel %vm155, %v1316, 0
    %1321 = vmatprep.subr.mxu0 0.0
    %1322 = vmatpush1.xpose.msra.mxu0 %v1319
    %1323 = vmatprep.subr.mxu0 0.0
    %1324 = vmatpush1.xpose.msra.mxu0 0.0
    %1325 = vmatprep.subr.mxu0 0.0
    %1326 = vmatpush1.xpose.msra.mxu0 0.0
    %1327 = vmatprep.subr.mxu0 0.0
    %1328 = vmatpush1.xpose.msra.mxu0 0.0
    %1329 = vmatprep.subr.mxu0 0.0
    %1330 = vmatpush1.xpose.msra.mxu0 0.0
    %1331 = vmatprep.subr.mxu0 0.0
    %1332 = vmatpush1.xpose.msra.mxu0 0.0
    %1333 = vmatprep.subr.mxu0 0.0
    %1334 = vmatpush1.xpose.msra.mxu0 0.0
    %1335 = vmatprep.subr.mxu0 0.0
    %1336 = vmatpush1.xpose.msra.mxu0 0.0
    %1337 = vmatprep.subr.mxu0 0.0
    %1338 = vmatpush1.xpose.msra.mxu0 0.0
    %1339 = vmatprep.subr.mxu0 0.0
    %1340 = vmatpush1.xpose.msra.mxu0 0.0
    %1341 = vmatprep.subr.mxu0 0.0
    %1342 = vmatpush1.xpose.msra.mxu0 0.0
    %1343 = vmatprep.subr.mxu0 0.0
    %1344 = vmatpush1.xpose.msra.mxu0 0.0
    %1345 = vmatprep.subr.mxu0 0.0
    %1346 = vmatpush1.xpose.msra.mxu0 0.0
    %1347 = vmatprep.subr.mxu0 0.0
    %1348 = vmatpush1.xpose.msra.mxu0 0.0
    %1349 = vmatprep.subr.mxu0 0.0
    %1350 = vmatpush1.xpose.msra.mxu0 0.0
    %1351 = vmatprep.subr.mxu0 0.0
    %1352 = vmatpush1.xpose.msra.mxu0 0.0
    %1353 = vmatprep.subr.mxu0 0.0
    %1354 = vmatpush1.xpose.msra.mxu0 0.0
    %1355 = vmatprep.subr.mxu0 0.0
    %1356 = vmatpush1.xpose.msra.mxu0 0.0
    %1357 = vmatprep.subr.mxu0 0.0
    %1358 = vmatpush1.xpose.msra.mxu0 0.0
    %1359 = vmatprep.subr.mxu0 0.0
    %1360 = vmatpush1.xpose.msra.mxu0 0.0
    %1361 = vmatprep.subr.mxu0 0.0
    %1362 = vmatpush1.xpose.msra.mxu0 0.0
    %1363 = vmatprep.subr.mxu0 0.0
    %1364 = vmatpush1.xpose.msra.mxu0 0.0
    %1365 = vmatprep.subr.mxu0 0.0
    %1366 = vmatpush1.xpose.msra.mxu0 0.0
    %1367 = vmatprep.subr.mxu0 0.0
    %1368 = vmatpush1.xpose.msra.mxu0 0.0
    %1369 = vmatprep.subr.mxu0 0.0
    %1370 = vmatpush1.xpose.msra.mxu0 0.0
    %1371 = vmatprep.subr.mxu0 0.0
    %1372 = vmatpush1.xpose.msra.mxu0 0.0
    %1373 = vmatprep.subr.mxu0 0.0
    %1374 = vmatpush1.xpose.msra.mxu0 0.0
    %1375 = vmatprep.subr.mxu0 0.0
    %1376 = vmatpush1.xpose.msra.mxu0 0.0
    %1377 = vmatprep.subr.mxu0 0.0
    %1378 = vmatpush1.xpose.msra.mxu0 0.0
    %1379 = vmatprep.subr.mxu0 0.0
    %1380 = vmatpush1.xpose.msra.mxu0 0.0
    %1381 = vmatprep.subr.mxu0 0.0
    %1382 = vmatpush1.xpose.msra.mxu0 0.0
    %1383 = vmatprep.subr.mxu0 0.0
    %1384 = vmatpush1.xpose.msra.mxu0 0.0
    %1385 = vmatprep.mubr.f32.mxu0 0.0
    %1386 = vmatmul.mubr.f32.gmra.mrb[0].mxu0 %v1317
    %v1387 = vpop.f32.mrb[0].mxu0
    %v1388 = vadd.f32 0.0, %v1387
    %v1389 = vpop.f32.mrb[0].mxu0
    %1390 = vdwg.mxu0
    %v1391 = vmul.f32 %v1388, 0.35355338
    %v1392 = vsel %vm155, %v1391, -inf
    %1393 = vmax.xlane.f32.xlu0 %v1392
    %v1394 = vpop.xlane.xlu0 %1393
    %v1395 = vsub.f32 %v1391, %v1394
    %v1396 = vmul.f32 %v1395, 1.442695
    %v1397 = vpow.pop %v1396
    %v1398 = vsel %vm155, %v1397, 0.0
    %1399 = vadd.xlane.f32.xlu0 %v1398
    %v1400 = vpop.xlane.xlu0 %1399
    %v1401 = vrcp.pop %v1400
    %v1402 = vmul.f32 %v1397, %v1401
    %1403 = vrot.lane.b32.xlu0 %v149, 40
    %v1404 = vpop.permute.xlu0 %1403
    %v1407 = vsel %vm155, %v1402, 0
    %1409 = vmatprep.subr.mxu0 0.0
    %1410 = vmatpush1.msra.mxu0 %v1404
    %1411 = vmatprep.subr.mxu0 0.0
    %1412 = vmatpush1.msra.mxu0 0.0
    %1413 = vmatprep.subr.mxu0 0.0
    %1414 = vmatpush1.msra.mxu0 0.0
    %1415 = vmatprep.subr.mxu0 0.0
    %1416 = vmatpush1.msra.mxu0 0.0
    %1417 = vmatprep.subr.mxu0 0.0
    %1418 = vmatpush1.msra.mxu0 0.0
    %1419 = vmatprep.subr.mxu0 0.0
    %1420 = vmatpush1.msra.mxu0 0.0
    %1421 = vmatprep.subr.mxu0 0.0
    %1422 = vmatpush1.msra.mxu0 0.0
    %1423 = vmatprep.subr.mxu0 0.0
    %1424 = vmatpush1.msra.mxu0 0.0
    %1425 = vmatprep.subr.mxu0 0.0
    %1426 = vmatpush1.msra.mxu0 0.0
    %1427 = vmatprep.subr.mxu0 0.0
    %1428 = vmatpush1.msra.mxu0 0.0
    %1429 = vmatprep.subr.mxu0 0.0
    %1430 = vmatpush1.msra.mxu0 0.0
    %1431 = vmatprep.subr.mxu0 0.0
    %1432 = vmatpush1.msra.mxu0 0.0
    %1433 = vmatprep.subr.mxu0 0.0
    %1434 = vmatpush1.msra.mxu0 0.0
    %1435 = vmatprep.subr.mxu0 0.0
    %1436 = vmatpush1.msra.mxu0 0.0
    %1437 = vmatprep.subr.mxu0 0.0
    %1438 = vmatpush1.msra.mxu0 0.0
    %1439 = vmatprep.subr.mxu0 0.0
    %1440 = vmatpush1.msra.mxu0 0.0
    %1441 = vmatprep.subr.mxu0 0.0
    %1442 = vmatpush1.msra.mxu0 0.0
    %1443 = vmatprep.subr.mxu0 0.0
    %1444 = vmatpush1.msra.mxu0 0.0
    %1445 = vmatprep.subr.mxu0 0.0
    %1446 = vmatpush1.msra.mxu0 0.0
    %1447 = vmatprep.subr.mxu0 0.0
    %1448 = vmatpush1.msra.mxu0 0.0
    %1449 = vmatprep.subr.mxu0 0.0
    %1450 = vmatpush1.msra.mxu0 0.0
    %1451 = vmatprep.subr.mxu0 0.0
    %1452 = vmatpush1.msra.mxu0 0.0
    %1453 = vmatprep.subr.mxu0 0.0
    %1454 = vmatpush1.msra.mxu0 0.0
    %1455 = vmatprep.subr.mxu0 0.0
    %1456 = vmatpush1.msra.mxu0 0.0
    %1457 = vmatprep.subr.mxu0 0.0
    %1458 = vmatpush1.msra.mxu0 0.0
    %1459 = vmatprep.subr.mxu0 0.0
    %1460 = vmatpush1.msra.mxu0 0.0
    %1461 = vmatprep.subr.mxu0 0.0
    %1462 = vmatpush1.msra.mxu0 0.0
    %1463 = vmatprep.subr.mxu0 0.0
    %1464 = vmatpush1.msra.mxu0 0.0
    %1465 = vmatprep.subr.mxu0 0.0
    %1466 = vmatpush1.msra.mxu0 0.0
    %1467 = vmatprep.subr.mxu0 0.0
    %1468 = vmatpush1.msra.mxu0 0.0
    %1469 = vmatprep.subr.mxu0 0.0
    %1470 = vmatpush1.msra.mxu0 0.0
    %1471 = vmatprep.subr.mxu0 0.0
    %1472 = vmatpush1.msra.mxu0 0.0
    %1473 = vmatprep.mubr.f32.mxu0 0.0
    %1474 = vmatmul.mubr.f32.gmra.mrb[0].mxu0 %v1407
    %v1475 = vpop.f32.mrb[0].mxu0
    %v1476 = vadd.f32 0.0, %v1475
    %v1477 = vpop.f32.mrb[0].mxu0
    %1478 = vdwg.mxu0
    %1481 = vrot.lane.b32.xlu0 %v646, 8
    %v1482 = vpop.permute.xlu0 %1481
    %1483 = vrot.lane.b32.xlu0 %v812, 8
    %v1484 = vpop.permute.xlu0 %1483
    %1489 = vrot.lane.b32.xlu0 %v978, 16
    %v1490 = vpop.permute.xlu0 %1489
    %1491 = vrot.lane.b32.xlu0 %v1144, 16
    %v1492 = vpop.permute.xlu0 %1491
    %1497 = vrot.lane.b32.xlu0 %v1310, 24
    %v1498 = vpop.permute.xlu0 %1497
    %1499 = vrot.lane.b32.xlu0 %v1476, 24
    %v1500 = vpop.permute.xlu0 %1499
    %v1503 = vsel %vm155, %v315, %v1482
    %v1504 = vsel %vm155, %v480, %v1484
    %vm1505 = vcmask 130048
    %v1506 = vsel %vm1505, %v1503, %v1490
    %v1507 = vsel %vm1505, %v1504, %v1492
    %vm1508 = vcmask 195584
    %v1509 = vsel %vm1508, %v1506, %v1498
    %v1510 = vsel %vm1508, %v1507, %v1500
    %v1511 = vlaneseq
    %v1512 = vshrl.u32 %v1511, 7
    %v1513 = vsub.s32 0, %v1512
    %v1514 = vrot.slane %v69, %v1513
    %v1516 = vsel %vm70, %v1509, 0
    %v1519 = vsel %vm70, %v1510, 0
    %1521 = vmatprep.subr.mxu0 0.0
    %1522 = vmatpush1.msra.mxu0 %v65
    %1523 = vmatprep.subr.mxu0 0.0
    %1524 = vmatpush1.msra.mxu0 %v66
    %1525 = vmatprep.subr.mxu0 0.0
    %1526 = vmatpush1.msra.mxu0 %v67
    %1527 = vmatprep.subr.mxu0 0.0
    %1528 = vmatpush1.msra.mxu0 %v68
    %1529 = vmatprep.subr.mxu0 0.0
    %1530 = vmatpush1.msra.mxu0 0.0
    %1531 = vmatprep.subr.mxu0 0.0
    %1532 = vmatpush1.msra.mxu0 0.0
    %1533 = vmatprep.subr.mxu0 0.0
    %1534 = vmatpush1.msra.mxu0 0.0
    %1535 = vmatprep.subr.mxu0 0.0
    %1536 = vmatpush1.msra.mxu0 0.0
    %1537 = vmatprep.subr.mxu0 0.0
    %1538 = vmatpush1.msra.mxu0 0.0
    %1539 = vmatprep.subr.mxu0 0.0
    %1540 = vmatpush1.msra.mxu0 0.0
    %1541 = vmatprep.subr.mxu0 0.0
    %1542 = vmatpush1.msra.mxu0 0.0
    %1543 = vmatprep.subr.mxu0 0.0
    %1544 = vmatpush1.msra.mxu0 0.0
    %1545 = vmatprep.subr.mxu0 0.0
    %1546 = vmatpush1.msra.mxu0 0.0
    %1547 = vmatprep.subr.mxu0 0.0
    %1548 = vmatpush1.msra.mxu0 0.0
    %1549 = vmatprep.subr.mxu0 0.0
    %1550 = vmatpush1.msra.mxu0 0.0
    %1551 = vmatprep.subr.mxu0 0.0
    %1552 = vmatpush1.msra.mxu0 0.0
    %1553 = vmatprep.subr.mxu0 0.0
    %1554 = vmatpush1.msra.mxu0 0.0
    %1555 = vmatprep.subr.mxu0 0.0
    %1556 = vmatpush1.msra.mxu0 0.0
    %1557 = vmatprep.subr.mxu0 0.0
    %1558 = vmatpush1.msra.mxu0 0.0
    %1559 = vmatprep.subr.mxu0 0.0
    %1560 = vmatpush1.msra.mxu0 0.0
    %1561 = vmatprep.subr.mxu0 0.0
    %1562 = vmatpush1.msra.mxu0 0.0
    %1563 = vmatprep.subr.mxu0 0.0
    %1564 = vmatpush1.msra.mxu0 0.0
    %1565 = vmatprep.subr.mxu0 0.0
    %1566 = vmatpush1.msra.mxu0 0.0
    %1567 = vmatprep.subr.mxu0 0.0
    %1568 = vmatpush1.msra.mxu0 0.0
    %1569 = vmatprep.subr.mxu0 0.0
    %1570 = vmatpush1.msra.mxu0 0.0
    %1571 = vmatprep.subr.mxu0 0.0
    %1572 = vmatpush1.msra.mxu0 0.0
    %1573 = vmatprep.subr.mxu0 0.0
    %1574 = vmatpush1.msra.mxu0 0.0
    %1575 = vmatprep.subr.mxu0 0.0
    %1576 = vmatpush1.msra.mxu0 0.0
    %1577 = vmatprep.subr.mxu0 0.0
    %1578 = vmatpush1.msra.mxu0 0.0
    %1579 = vmatprep.subr.mxu0 0.0
    %1580 = vmatpush1.msra.mxu0 0.0
    %1581 = vmatprep.subr.mxu0 0.0
    %1582 = vmatpush1.msra.mxu0 0.0
    %1583 = vmatprep.subr.mxu0 0.0
    %1584 = vmatpush1.msra.mxu0 0.0
    %1585 = vmatprep.mubr.f32.mxu0 0.0
    %1586 = vmatmul.mubr.f32.gmra.mrb[0].mxu0 %v1516
    %v1587 = vpop.f32.mrb[0].mxu0
    %v1588 = vadd.f32 %v1514, %v1587
    %v1589 = vpop.f32.mrb[0].mxu0
    %1590 = vmatprep.mubr.f32.mxu0 0.0
    %1591 = vmatmul.mubr.f32.gmra.mrb[0].mxu0 %v1519
    %v1592 = vpop.f32.mrb[0].mxu0
    %v1593 = vadd.f32 %v1514, %v1592
    %v1594 = vpop.f32.mrb[0].mxu0
    %1595 = vdwg.mxu0
    %v1596 = vmul.f32 %v59, 0.5
    %v1597 = vmul.f32 %v60, 0.5
    %v1598 = vadd.f32 %v1588, %v1596
    %v1599 = vadd.f32 %v1593, %v1597
    %v1600 = vsel %vm70, %v1598, 0.0
    %1601 = vadd.xlane.f32.xlu0 %v1600
    %v1602 = vpop.xlane.xlu0 %1601
    %v1603 = vsel %vm70, %v1599, 0.0
    %1604 = vadd.xlane.f32.xlu0 %v1603
    %v1605 = vpop.xlane.xlu0 %1604
    %v1606 = vrcp.pop 32.0
    %v1607 = vmul.f32 %v1602, %v1606
    %v1608 = vmul.f32 %v1605, %v1606
    %v1609 = vsub.f32 %v1598, %v1607
    %v1610 = vsub.f32 %v1599, %v1608
    %v1611 = vmul.f32 %v1609, %v1609
    %v1612 = vmul.f32 %v1610, %v1610
    %v1613 = vsel %vm70, %v1611, 0.0
    %1614 = vadd.xlane.f32.xlu0 %v1613
    %v1615 = vpop.xlane.xlu0 %1614
    %v1616 = vsel %vm70, %v1612, 0.0
    %1617 = vadd.xlane.f32.xlu0 %v1616
    %v1618 = vpop.xlane.xlu0 %1617
    %v1619 = vmul.f32 %v1615, %v1606
    %v1620 = vmul.f32 %v1618, %v1606
    %v1621 = vadd.f32 %v1619, 1e-05
    %v1622 = vadd.f32 %v1620, 1e-05
    %v1623 = vrsqrt.pop %v1621
    %v1624 = vrsqrt.pop %v1622
    %v1625 = vmul.f32 %v1609, %v1623
    %v1626 = vmul.f32 %v1610, %v1624
    %v1627 = vlaneseq
    %v1628 = vshrl.u32 %v1627, 7
    %v1629 = vsub.s32 1, %v1628
    %v1630 = vrot.slane %v69, %v1629
    %v1631 = vmul.f32 %v1625, %v1630
    %v1632 = vmul.f32 %v1626, %v1630
    %v1633 = vlaneseq
    %v1634 = vshrl.u32 %v1633, 7
    %v1635 = vsub.s32 2, %v1634
    %v1636 = vrot.slane %v69, %v1635
    %v1637 = vadd.f32 %v1631, %v1636
    %v1638 = vadd.f32 %v1632, %v1636
    %1639 = vst.msk [vmem:[#allocation8] sm:$0xff] %vm70, %v1637
    %1640 = vst.msk [vmem:[#allocation8 + $0x8] sm:$0xff] %vm70, %v1638
    // Predicated region
    $region30: #{postln_attn_block.1} parent=1 // pred_check
      _
    $region31: #{postln_attn_block.1} parent=1 // pred_check_branch
      %1642 = sbr.rel (0) target = $region33
    $region32: #{postln_attn_block.1} parent=1 // pred_region
      %s1644 = ssub.s32 256, 256
      %1645 = vsyncadd [#allocation4], %s1644
      %s1646 = sshll.u32 [#allocation8], 4
      %s1647 = int_to_ptr.vmem [resolvable:$true] %s1646
      %1652 = dma.vmem_to_hbm [thread:$0]  %s1647, 256, %s4, [#allocation4], 128, 128, 8
    $region33: #{postln_attn_block.1} parent=1 // pred_fallthru
      _
    // Predicated region
    $region34: #{postln_attn_block.1} parent=1 // pred_check
      _
    $region35: #{postln_attn_block.1} parent=1 // pred_check_branch
      %1654 = sbr.rel (0) target = $region37
    $region36: #{postln_attn_block.1} parent=1 // pred_region
      %1655 = dma.done [#allocation4], 256
    $region37: #{postln_attn_block.1} parent=1 // pred_fallthru
      _
    %1656 = vsyncpa [#allocation3], 1
    %1657 = vsyncpa [#allocation6], 1
    %1658 = vsyncpa [#allocation4], 1

</llo_original>
